<compile_context>
chip_gen: v5e
topology: v5e:2x2
jax: 0.10.0
libtpu: 0.0.40
codegen_flags: <defaults>
</compile_context>

<pallas_src>
import functools

import jax
import jax.numpy as jnp
from jax.experimental import pallas as pl
from jax.experimental.pallas import tpu as pltpu

# FCN architecture: 500 -> 100 -> 100 -> 100 -> 50 -> 1 (ReLU between, none at end)
LAYER_DIMS = [500, 100, 100, 100, 50, 1]


def _prefers_pair_packing():
    """True on 256x256-MXU chips (v6e / v7x); False on 128x128-MXU chips (<= v5)."""
    try:
        kind = jax.devices()[0].device_kind.lower()
    except Exception:
        return True
    for tag in ("v2", "v3", "v4", "v5"):
        if tag in kind:
            return False
    return True


def _choose_nb(n, g, max_nb=8):
    """Pick networks-per-step (multiple of g, <= max_nb) minimizing padding waste."""
    best_nb, best_waste = g, (-n) % g
    for cand in range(g, max_nb + 1, g):
        waste = (-n) % cand
        if waste < best_waste or (waste == best_waste and cand > best_nb):
            best_nb, best_waste = cand, waste
    return best_nb


def _fcn_cluster_kernel(x_ref, w1_ref, w2_ref, w3_ref, w4_ref, misc_ref,
                        o_ref, acc_ref, *, ngroups, pw, g):
    step = pl.program_id(0)

    @pl.when(step == 0)
    def _():
        acc_ref[...] = jnp.full(acc_ref.shape, -jnp.inf, acc_ref.dtype)

    x = x_ref[...]                                          # [B, 500] bf16
    # Layer 1 for all nb networks at once: [B,500] @ [500, nb*128] (lane-dense,
    # 128-lane stride per network so every slice below is lane-aligned).
    h1_all = jnp.dot(x, w1_ref[0], preferred_element_type=jnp.float32)

    best = acc_ref[...]                                     # [B, 1] f32 running max

    for p in range(ngroups):                                # static unroll over MXU groups
        m = misc_ref[0, p]                                  # [6, pw] f32: b1,b2,b3,b4,w5,b5
        h = h1_all[:, p * pw:(p + 1) * pw] + m[0:1, :]
        h = jnp.maximum(h, 0.0)                             # [B, pw]

        h = jnp.dot(h.astype(jnp.bfloat16), w2_ref[0, p],
                    preferred_element_type=jnp.float32)
        h = jnp.maximum(h + m[1:2, :], 0.0)

        h = jnp.dot(h.astype(jnp.bfloat16), w3_ref[0, p],
                    preferred_element_type=jnp.float32)
        h = jnp.maximum(h + m[2:3, :], 0.0)

        h = jnp.dot(h.astype(jnp.bfloat16), w4_ref[0, p],
                    preferred_element_type=jnp.float32)
        h = jnp.maximum(h + m[3:4, :], 0.0)                 # [B, pw] (50 valid per net)

        # Final Linear(50, 1) on the VPU/XLU: multiply + per-network lane reduce.
        prod = h * m[4:5, :]                                # [B, pw]
        for q in range(g):                                  # g networks per MXU group
            y = jnp.sum(prod[:, q * 128:(q + 1) * 128], axis=-1, keepdims=True)
            y = y + m[5:6, q * 128:q * 128 + 1]             # + b5 (scalar)
            best = jnp.maximum(best, y)

    acc_ref[...] = best

    @pl.when(step == pl.num_programs(0) - 1)
    def _():
        o_ref[...] = best


def init_params(key, num_networks):
    """Per-network params mimicking nn.Linear's U(-1/sqrt(fan_in), 1/sqrt(fan_in)).
    Weights stored pre-transposed as [N, in, out]; biases as [N, out]; float32."""
    params = {}
    for li in range(5):
        d_in, d_out = LAYER_DIMS[li], LAYER_DIMS[li + 1]
        key, kw, kb = jax.random.split(key, 3)
        bound = 1.0 / (d_in ** 0.5)
        params[f"w{li + 1}"] = jax.random.uniform(
            kw, (num_networks, d_in, d_out), jnp.float32, -bound, bound)
        params[f"b{li + 1}"] = jax.random.uniform(
            kb, (num_networks, d_out), jnp.float32, -bound, bound)
    return params


def pack_params(params, *, nb=None, pair_pack=None):
    """Repack per-network params for the kernel.

    pair_pack: pack 2 networks per 256x256 block-diagonal tile for layers 2-4
    (v6e/v7x); otherwise 1 network per 128x128 tile (v5e and older).
    nb: networks per grid step (multiple of the pack width); auto-chosen to
    divide num_networks when possible (zero padding). Any remaining padding is
    cyclic duplication, which leaves the max unchanged.
    """
    n = params["w1"].shape[0]
    if pair_pack is None:
        pair_pack = _prefers_pair_packing()
    g = 2 if pair_pack else 1
    pw = 128 * g
    if nb is None:
        nb = _choose_nb(n, g)
    assert nb % g == 0
    n_pad = ((n + nb - 1) // nb) * nb
    idx = jnp.arange(n_pad) % n
    G = n_pad // nb
    ngroups = nb // g

    def take(name):
        return jnp.take(params[name], idx, axis=0)

    # --- Layer-1 weights: lane-dense, 128-lane stride per network --------------
    w1 = take("w1")                                           # [n_pad, 500, 100]
    w1 = jnp.pad(w1, ((0, 0), (0, 0), (0, 128 - LAYER_DIMS[1])))
    w1p = (w1.reshape(G, nb, LAYER_DIMS[0], 128)
              .transpose(0, 2, 1, 3)
              .reshape(G, LAYER_DIMS[0], nb * 128)
              .astype(jnp.bfloat16))

    # --- Layers 2-4: g networks per [pw, pw] block-diagonal tile ----------------
    def pack_block(name, d_in, d_out):
        w = take(name).reshape(G, ngroups, g, d_in, d_out)
        out = jnp.zeros((G, ngroups, pw, pw), jnp.float32)
        for q in range(g):
            out = out.at[:, :, q * 128:q * 128 + d_in,
                         q * 128:q * 128 + d_out].set(w[:, :, q])
        return out.astype(jnp.bfloat16)

    w2p = pack_block("w2", 100, 100)
    w3p = pack_block("w3", 100, 100)
    w4p = pack_block("w4", 100, 50)

    # --- Biases + final-layer row/bias, one small f32 array per group ----------
    misc = jnp.zeros((G, ngroups, 6, pw), jnp.float32)
    rows = [(0, take("b1")), (1, take("b2")), (2, take("b3")),
            (3, take("b4")), (4, take("w5")[..., 0]), (5, take("b5"))]
    for row, vec in rows:
        width = vec.shape[-1]
        v = vec.reshape(G, ngroups, g, width)
        for q in range(g):
            misc = misc.at[:, :, row, q * 128:q * 128 + width].set(v[:, :, q])

    return {"w1p": w1p, "w2p": w2p, "w3p": w3p, "w4p": w4p, "misc": misc}


def fcn_cluster_forward(x, packed):
    """x: [B, 500] float32.  packed: output of pack_params.  Returns [B, 1] f32."""
    b = x.shape[0]
    w1p, w2p, w3p, w4p, misc = (packed["w1p"], packed["w2p"], packed["w3p"],
                                packed["w4p"], packed["misc"])
    G = w1p.shape[0]
    nb128 = w1p.shape[2]
    ngroups = w2p.shape[1]
    pw = w2p.shape[2]
    g = pw // 128

    xb = x.astype(jnp.bfloat16)

    out = pl.pallas_call(
        functools.partial(_fcn_cluster_kernel, ngroups=ngroups, pw=pw, g=g),
        out_shape=jax.ShapeDtypeStruct((b, 1), jnp.float32),
        grid_spec=pltpu.PrefetchScalarGridSpec(
            num_scalar_prefetch=0,
            grid=(G,),                                        # network groups (reduction)
            in_specs=[
                pl.BlockSpec((b, LAYER_DIMS[0]), lambda s: (0, 0)),          # x
                pl.BlockSpec((1, LAYER_DIMS[0], nb128), lambda s: (s, 0, 0)),  # W1 packed
                pl.BlockSpec((1, ngroups, pw, pw), lambda s: (s, 0, 0, 0)),    # W2
                pl.BlockSpec((1, ngroups, pw, pw), lambda s: (s, 0, 0, 0)),    # W3
                pl.BlockSpec((1, ngroups, pw, pw), lambda s: (s, 0, 0, 0)),    # W4
                pl.BlockSpec((1, ngroups, 6, pw), lambda s: (s, 0, 0, 0)),     # biases + W5
            ],
            out_specs=pl.BlockSpec((b, 1), lambda s: (0, 0)),
            scratch_shapes=[pltpu.VMEM((b, 1), jnp.float32)],
        ),
        compiler_params=pltpu.CompilerParams(
            dimension_semantics=("arbitrary",),               # carries the running max
        ),
    )(xb, w1p, w2p, w3p, w4p, misc)

    return out                                                # [B, 1]


def reference_forward(x, params):
    """Pure-JAX reference (same bf16-weight / f32-accumulate numerics as the kernel)."""
    n = params["w1"].shape[0]
    xb = x.astype(jnp.bfloat16)
    outs = []
    for i in range(n):
        h = jnp.dot(xb, params["w1"][i].astype(jnp.bfloat16),
                    preferred_element_type=jnp.float32) + params["b1"][i]
        h = jnp.maximum(h, 0.0)
        for li in (2, 3, 4):
            h = jnp.dot(h.astype(jnp.bfloat16),
                        params[f"w{li}"][i].astype(jnp.bfloat16),
                        preferred_element_type=jnp.float32) + params[f"b{li}"][i]
            h = jnp.maximum(h, 0.0)
        y = jnp.sum(h * params["w5"][i][:, 0], axis=-1, keepdims=True) + params["b5"][i]
        outs.append(y)                                        # [B, 1]
    return jnp.max(jnp.stack(outs, axis=1), axis=1)           # [B, 1]


if __name__ == "__main__":
    key = jax.random.PRNGKey(0)
    key, kx, kp = jax.random.split(key, 3)

    batch = 8
    num_networks = 20

    x = jax.random.normal(kx, (batch, LAYER_DIMS[0]), jnp.float32)
    params = init_params(kp, num_networks)
    packed = pack_params(params)          # auto: pair-packed on v6e/v7x, nb divides 20

    out = fcn_cluster_forward(x, packed)
    out = jax.block_until_ready(out)

    ref = reference_forward(x, params)
    assert out.shape == (batch, 1)
    # Both sides use bf16 MXU inputs with f32 accumulation; only reduction-order
    # differences remain, so a tight tolerance holds.
    assert jnp.allclose(out, ref, atol=2e-3, rtol=2e-3), (out, ref)

    print("KERNEL_OK")
</pallas_src>

<mosaic_0001>
module attributes {stable_mosaic.version = 11 : i64} {
  func.func @_fcn_cluster_kernel(%arg0: i32, %arg1: memref<8x500xbf16, #tpu.memory_space<vmem>>, %arg2: memref<1x500x512xbf16, #tpu.memory_space<vmem>>, %arg3: memref<1x2x256x256xbf16, #tpu.memory_space<vmem>>, %arg4: memref<1x2x256x256xbf16, #tpu.memory_space<vmem>>, %arg5: memref<1x2x256x256xbf16, #tpu.memory_space<vmem>>, %arg6: memref<1x2x6x256xf32, #tpu.memory_space<vmem>>, %arg7: memref<8x1xf32, #tpu.memory_space<vmem>>, %arg8: memref<8x1xf32, #tpu.memory_space<vmem>>) attributes {dimension_semantics = [#tpu.dimension_semantics<arbitrary>], iteration_bounds = array<i64: 5>, scalar_prefetch = 0 : i64, scratch_operands = 1 : i64, tpu.core_type = #tpu.core_type<tc>, window_params = [{pipeline_mode = #tpu.pipeline_mode<synchronous>, transform_indices = @transform_0, window_bounds = array<i64: 8, 500>}, {transform_indices = @transform_1, window_bounds = array<i64: 1, 500, 512>}, {transform_indices = @transform_2, window_bounds = array<i64: 1, 2, 256, 256>}, {transform_indices = @transform_3, window_bounds = array<i64: 1, 2, 256, 256>}, {transform_indices = @transform_4, window_bounds = array<i64: 1, 2, 256, 256>}, {transform_indices = @transform_5, window_bounds = array<i64: 1, 2, 6, 256>}, {pipeline_mode = #tpu.pipeline_mode<synchronous>, transform_indices = @transform_6, window_bounds = array<i64: 8, 1>}]} {
    %c0_i32 = arith.constant 0 : i32
    %0 = arith.cmpi eq, %arg0, %c0_i32 : i32
    %1 = arith.extui %0 : i1 to i32
    %c0_i32_0 = arith.constant 0 : i32
    %2 = arith.cmpi ne, %1, %c0_i32_0 : i32
    scf.if %2 {
      %cst_59 = arith.constant 0xFF800000 : f32
      %116 = vector.broadcast %cst_59 : f32 to vector<8x1xf32>
      %c0_60 = arith.constant 0 : index
      %c0_61 = arith.constant 0 : index
      %117 = vector.load %arg8[%c0_60, %c0_61] : memref<8x1xf32, #tpu.memory_space<vmem>>, vector<8x1xf32>
      tpu.vector_store %arg8[%c0_60, %c0_61], %116 {strides = array<i32>} : memref<8x1xf32, #tpu.memory_space<vmem>>, vector<8x1xf32>,
    } else {
    }
    %c0 = arith.constant 0 : index
    %c0_1 = arith.constant 0 : index
    %3 = vector.load %arg1[%c0, %c0_1] : memref<8x500xbf16, #tpu.memory_space<vmem>>, vector<8x500xbf16>
    %c0_2 = arith.constant 0 : index
    %c0_3 = arith.constant 0 : index
    %c0_4 = arith.constant 0 : index
    %4 = vector.load %arg2[%c0_2, %c0_3, %c0_4] : memref<1x500x512xbf16, #tpu.memory_space<vmem>>, vector<1x500x512xbf16>
    %5 = vector.shape_cast %4 : vector<1x500x512xbf16> to vector<500x512xbf16>
    %cst = arith.constant dense<0.000000e+00> : vector<8x512xf32>
    %6 = tpu.matmul %3, %5, %cst {dimension_numbers = #tpu.dot_dimension_numbers<[1], [0], [0], [1], [0, 0, 1, 1], [], []>} : vector<8x500xbf16>, vector<500x512xbf16>, vector<8x512xf32> -> vector<8x512xf32>
    %c0_5 = arith.constant 0 : index
    %c0_6 = arith.constant 0 : index
    %7 = vector.load %arg8[%c0_5, %c0_6] : memref<8x1xf32, #tpu.memory_space<vmem>>, vector<8x1xf32>
    %c0_7 = arith.constant 0 : index
    %c0_8 = arith.constant 0 : index
    %c0_9 = arith.constant 0 : index
    %c0_10 = arith.constant 0 : index
    %8 = vector.load %arg6[%c0_7, %c0_8, %c0_9, %c0_10] : memref<1x2x6x256xf32, #tpu.memory_space<vmem>>, vector<1x1x6x256xf32>
    %9 = vector.shape_cast %8 : vector<1x1x6x256xf32> to vector<6x256xf32>
    %10 = vector.extract_strided_slice %6 {offsets = [0, 0], sizes = [8, 256], strides = [1, 1]} : vector<8x512xf32> to vector<8x256xf32>
    %11 = vector.extract_strided_slice %9 {offsets = [0, 0], sizes = [1, 256], strides = [1, 1]} : vector<6x256xf32> to vector<1x256xf32>
    %12 = vector.broadcast %11 : vector<1x256xf32> to vector<8x256xf32>
    %13 = arith.addf %10, %12 : vector<8x256xf32>
    %cst_11 = arith.constant 0.000000e+00 : f32
    %14 = vector.broadcast %cst_11 : f32 to vector<8x256xf32>
    %15 = arith.maximumf %13, %14 : vector<8x256xf32>
    %16 = arith.truncf %15 : vector<8x256xf32> to vector<8x256xbf16>
    %c0_12 = arith.constant 0 : index
    %c0_13 = arith.constant 0 : index
    %c0_14 = arith.constant 0 : index
    %c0_15 = arith.constant 0 : index
    %17 = vector.load %arg3[%c0_12, %c0_13, %c0_14, %c0_15] : memref<1x2x256x256xbf16, #tpu.memory_space<vmem>>, vector<1x1x256x256xbf16>
    %18 = vector.shape_cast %17 : vector<1x1x256x256xbf16> to vector<256x256xbf16>
    %cst_16 = arith.constant dense<0.000000e+00> : vector<8x256xf32>
    %19 = tpu.matmul %16, %18, %cst_16 {dimension_numbers = #tpu.dot_dimension_numbers<[1], [0], [0], [1], [0, 0, 1, 1], [], []>} : vector<8x256xbf16>, vector<256x256xbf16>, vector<8x256xf32> -> vector<8x256xf32>
    %20 = vector.extract_strided_slice %9 {offsets = [1, 0], sizes = [1, 256], strides = [1, 1]} : vector<6x256xf32> to vector<1x256xf32>
    %21 = vector.broadcast %20 : vector<1x256xf32> to vector<8x256xf32>
    %22 = arith.addf %19, %21 : vector<8x256xf32>
    %cst_17 = arith.constant 0.000000e+00 : f32
    %23 = vector.broadcast %cst_17 : f32 to vector<8x256xf32>
    %24 = arith.maximumf %22, %23 : vector<8x256xf32>
    %25 = arith.truncf %24 : vector<8x256xf32> to vector<8x256xbf16>
    %c0_18 = arith.constant 0 : index
    %c0_19 = arith.constant 0 : index
    %c0_20 = arith.constant 0 : index
    %c0_21 = arith.constant 0 : index
    %26 = vector.load %arg4[%c0_18, %c0_19, %c0_20, %c0_21] : memref<1x2x256x256xbf16, #tpu.memory_space<vmem>>, vector<1x1x256x256xbf16>
    %27 = vector.shape_cast %26 : vector<1x1x256x256xbf16> to vector<256x256xbf16>
    %cst_22 = arith.constant dense<0.000000e+00> : vector<8x256xf32>
    %28 = tpu.matmul %25, %27, %cst_22 {dimension_numbers = #tpu.dot_dimension_numbers<[1], [0], [0], [1], [0, 0, 1, 1], [], []>} : vector<8x256xbf16>, vector<256x256xbf16>, vector<8x256xf32> -> vector<8x256xf32>
    %29 = vector.extract_strided_slice %9 {offsets = [2, 0], sizes = [1, 256], strides = [1, 1]} : vector<6x256xf32> to vector<1x256xf32>
    %30 = vector.broadcast %29 : vector<1x256xf32> to vector<8x256xf32>
    %31 = arith.addf %28, %30 : vector<8x256xf32>
    %cst_23 = arith.constant 0.000000e+00 : f32
    %32 = vector.broadcast %cst_23 : f32 to vector<8x256xf32>
    %33 = arith.maximumf %31, %32 : vector<8x256xf32>
    %34 = arith.truncf %33 : vector<8x256xf32> to vector<8x256xbf16>
    %c0_24 = arith.constant 0 : index
    %c0_25 = arith.constant 0 : index
    %c0_26 = arith.constant 0 : index
    %c0_27 = arith.constant 0 : index
    %35 = vector.load %arg5[%c0_24, %c0_25, %c0_26, %c0_27] : memref<1x2x256x256xbf16, #tpu.memory_space<vmem>>, vector<1x1x256x256xbf16>
    %36 = vector.shape_cast %35 : vector<1x1x256x256xbf16> to vector<256x256xbf16>
    %cst_28 = arith.constant dense<0.000000e+00> : vector<8x256xf32>
    %37 = tpu.matmul %34, %36, %cst_28 {dimension_numbers = #tpu.dot_dimension_numbers<[1], [0], [0], [1], [0, 0, 1, 1], [], []>} : vector<8x256xbf16>, vector<256x256xbf16>, vector<8x256xf32> -> vector<8x256xf32>
    %38 = vector.extract_strided_slice %9 {offsets = [3, 0], sizes = [1, 256], strides = [1, 1]} : vector<6x256xf32> to vector<1x256xf32>
    %39 = vector.broadcast %38 : vector<1x256xf32> to vector<8x256xf32>
    %40 = arith.addf %37, %39 : vector<8x256xf32>
    %cst_29 = arith.constant 0.000000e+00 : f32
    %41 = vector.broadcast %cst_29 : f32 to vector<8x256xf32>
    %42 = arith.maximumf %40, %41 : vector<8x256xf32>
    %43 = vector.extract_strided_slice %9 {offsets = [4, 0], sizes = [1, 256], strides = [1, 1]} : vector<6x256xf32> to vector<1x256xf32>
    %44 = vector.broadcast %43 : vector<1x256xf32> to vector<8x256xf32>
    %45 = arith.mulf %42, %44 : vector<8x256xf32>
    %46 = vector.extract_strided_slice %45 {offsets = [0, 0], sizes = [8, 128], strides = [1, 1]} : vector<8x256xf32> to vector<8x128xf32>
    %cst_30 = arith.constant dense<0.000000e+00> : vector<8xf32>
    %47 = vector.multi_reduction <add>, %46, %cst_30 [1] : vector<8x128xf32> to vector<8xf32>
    %48 = vector.shape_cast %47 : vector<8xf32> to vector<8x1xf32>
    %49 = vector.extract_strided_slice %9 {offsets = [5, 0], sizes = [1, 1], strides = [1, 1]} : vector<6x256xf32> to vector<1x1xf32>
    %50 = vector.broadcast %49 : vector<1x1xf32> to vector<8x1xf32>
    %51 = arith.addf %48, %50 : vector<8x1xf32>
    %52 = arith.maximumf %7, %51 : vector<8x1xf32>
    %53 = vector.extract_strided_slice %45 {offsets = [0, 128], sizes = [8, 128], strides = [1, 1]} : vector<8x256xf32> to vector<8x128xf32>
    %cst_31 = arith.constant dense<0.000000e+00> : vector<8xf32>
    %54 = vector.multi_reduction <add>, %53, %cst_31 [1] : vector<8x128xf32> to vector<8xf32>
    %55 = vector.shape_cast %54 : vector<8xf32> to vector<8x1xf32>
    %56 = vector.extract_strided_slice %9 {offsets = [5, 128], sizes = [1, 1], strides = [1, 1]} : vector<6x256xf32> to vector<1x1xf32>
    %57 = vector.broadcast %56 : vector<1x1xf32> to vector<8x1xf32>
    %58 = arith.addf %55, %57 : vector<8x1xf32>
    %59 = arith.maximumf %52, %58 : vector<8x1xf32>
    %c0_32 = arith.constant 0 : index
    %c1 = arith.constant 1 : index
    %c0_33 = arith.constant 0 : index
    %c0_34 = arith.constant 0 : index
    %60 = vector.load %arg6[%c0_32, %c1, %c0_33, %c0_34] : memref<1x2x6x256xf32, #tpu.memory_space<vmem>>, vector<1x1x6x256xf32>
    %61 = vector.shape_cast %60 : vector<1x1x6x256xf32> to vector<6x256xf32>
    %62 = vector.extract_strided_slice %6 {offsets = [0, 256], sizes = [8, 256], strides = [1, 1]} : vector<8x512xf32> to vector<8x256xf32>
    %63 = vector.extract_strided_slice %61 {offsets = [0, 0], sizes = [1, 256], strides = [1, 1]} : vector<6x256xf32> to vector<1x256xf32>
    %64 = vector.broadcast %63 : vector<1x256xf32> to vector<8x256xf32>
    %65 = arith.addf %62, %64 : vector<8x256xf32>
    %cst_35 = arith.constant 0.000000e+00 : f32
    %66 = vector.broadcast %cst_35 : f32 to vector<8x256xf32>
    %67 = arith.maximumf %65, %66 : vector<8x256xf32>
    %68 = arith.truncf %67 : vector<8x256xf32> to vector<8x256xbf16>
    %c0_36 = arith.constant 0 : index
    %c1_37 = arith.constant 1 : index
    %c0_38 = arith.constant 0 : index
    %c0_39 = arith.constant 0 : index
    %69 = vector.load %arg3[%c0_36, %c1_37, %c0_38, %c0_39] : memref<1x2x256x256xbf16, #tpu.memory_space<vmem>>, vector<1x1x256x256xbf16>
    %70 = vector.shape_cast %69 : vector<1x1x256x256xbf16> to vector<256x256xbf16>
    %cst_40 = arith.constant dense<0.000000e+00> : vector<8x256xf32>
    %71 = tpu.matmul %68, %70, %cst_40 {dimension_numbers = #tpu.dot_dimension_numbers<[1], [0], [0], [1], [0, 0, 1, 1], [], []>} : vector<8x256xbf16>, vector<256x256xbf16>, vector<8x256xf32> -> vector<8x256xf32>
    %72 = vector.extract_strided_slice %61 {offsets = [1, 0], sizes = [1, 256], strides = [1, 1]} : vector<6x256xf32> to vector<1x256xf32>
    %73 = vector.broadcast %72 : vector<1x256xf32> to vector<8x256xf32>
    %74 = arith.addf %71, %73 : vector<8x256xf32>
    %cst_41 = arith.constant 0.000000e+00 : f32
    %75 = vector.broadcast %cst_41 : f32 to vector<8x256xf32>
    %76 = arith.maximumf %74, %75 : vector<8x256xf32>
    %77 = arith.truncf %76 : vector<8x256xf32> to vector<8x256xbf16>
    %c0_42 = arith.constant 0 : index
    %c1_43 = arith.constant 1 : index
    %c0_44 = arith.constant 0 : index
    %c0_45 = arith.constant 0 : index
    %78 = vector.load %arg4[%c0_42, %c1_43, %c0_44, %c0_45] : memref<1x2x256x256xbf16, #tpu.memory_space<vmem>>, vector<1x1x256x256xbf16>
    %79 = vector.shape_cast %78 : vector<1x1x256x256xbf16> to vector<256x256xbf16>
    %cst_46 = arith.constant dense<0.000000e+00> : vector<8x256xf32>
    %80 = tpu.matmul %77, %79, %cst_46 {dimension_numbers = #tpu.dot_dimension_numbers<[1], [0], [0], [1], [0, 0, 1, 1], [], []>} : vector<8x256xbf16>, vector<256x256xbf16>, vector<8x256xf32> -> vector<8x256xf32>
    %81 = vector.extract_strided_slice %61 {offsets = [2, 0], sizes = [1, 256], strides = [1, 1]} : vector<6x256xf32> to vector<1x256xf32>
    %82 = vector.broadcast %81 : vector<1x256xf32> to vector<8x256xf32>
    %83 = arith.addf %80, %82 : vector<8x256xf32>
    %cst_47 = arith.constant 0.000000e+00 : f32
    %84 = vector.broadcast %cst_47 : f32 to vector<8x256xf32>
    %85 = arith.maximumf %83, %84 : vector<8x256xf32>
    %86 = arith.truncf %85 : vector<8x256xf32> to vector<8x256xbf16>
    %c0_48 = arith.constant 0 : index
    %c1_49 = arith.constant 1 : index
    %c0_50 = arith.constant 0 : index
    %c0_51 = arith.constant 0 : index
    %87 = vector.load %arg5[%c0_48, %c1_49, %c0_50, %c0_51] : memref<1x2x256x256xbf16, #tpu.memory_space<vmem>>, vector<1x1x256x256xbf16>
    %88 = vector.shape_cast %87 : vector<1x1x256x256xbf16> to vector<256x256xbf16>
    %cst_52 = arith.constant dense<0.000000e+00> : vector<8x256xf32>
    %89 = tpu.matmul %86, %88, %cst_52 {dimension_numbers = #tpu.dot_dimension_numbers<[1], [0], [0], [1], [0, 0, 1, 1], [], []>} : vector<8x256xbf16>, vector<256x256xbf16>, vector<8x256xf32> -> vector<8x256xf32>
    %90 = vector.extract_strided_slice %61 {offsets = [3, 0], sizes = [1, 256], strides = [1, 1]} : vector<6x256xf32> to vector<1x256xf32>
    %91 = vector.broadcast %90 : vector<1x256xf32> to vector<8x256xf32>
    %92 = arith.addf %89, %91 : vector<8x256xf32>
    %cst_53 = arith.constant 0.000000e+00 : f32
    %93 = vector.broadcast %cst_53 : f32 to vector<8x256xf32>
    %94 = arith.maximumf %92, %93 : vector<8x256xf32>
    %95 = vector.extract_strided_slice %61 {offsets = [4, 0], sizes = [1, 256], strides = [1, 1]} : vector<6x256xf32> to vector<1x256xf32>
    %96 = vector.broadcast %95 : vector<1x256xf32> to vector<8x256xf32>
    %97 = arith.mulf %94, %96 : vector<8x256xf32>
    %98 = vector.extract_strided_slice %97 {offsets = [0, 0], sizes = [8, 128], strides = [1, 1]} : vector<8x256xf32> to vector<8x128xf32>
    %cst_54 = arith.constant dense<0.000000e+00> : vector<8xf32>
    %99 = vector.multi_reduction <add>, %98, %cst_54 [1] : vector<8x128xf32> to vector<8xf32>
    %100 = vector.shape_cast %99 : vector<8xf32> to vector<8x1xf32>
    %101 = vector.extract_strided_slice %61 {offsets = [5, 0], sizes = [1, 1], strides = [1, 1]} : vector<6x256xf32> to vector<1x1xf32>
    %102 = vector.broadcast %101 : vector<1x1xf32> to vector<8x1xf32>
    %103 = arith.addf %100, %102 : vector<8x1xf32>
    %104 = arith.maximumf %59, %103 : vector<8x1xf32>
    %105 = vector.extract_strided_slice %97 {offsets = [0, 128], sizes = [8, 128], strides = [1, 1]} : vector<8x256xf32> to vector<8x128xf32>
    %cst_55 = arith.constant dense<0.000000e+00> : vector<8xf32>
    %106 = vector.multi_reduction <add>, %105, %cst_55 [1] : vector<8x128xf32> to vector<8xf32>
    %107 = vector.shape_cast %106 : vector<8xf32> to vector<8x1xf32>
    %108 = vector.extract_strided_slice %61 {offsets = [5, 128], sizes = [1, 1], strides = [1, 1]} : vector<6x256xf32> to vector<1x1xf32>
    %109 = vector.broadcast %108 : vector<1x1xf32> to vector<8x1xf32>
    %110 = arith.addf %107, %109 : vector<8x1xf32>
    %111 = arith.maximumf %104, %110 : vector<8x1xf32>
    %c0_56 = arith.constant 0 : index
    %c0_57 = arith.constant 0 : index
    %112 = vector.load %arg8[%c0_56, %c0_57] : memref<8x1xf32, #tpu.memory_space<vmem>>, vector<8x1xf32>
    tpu.vector_store %arg8[%c0_56, %c0_57], %111 {strides = array<i32>} : memref<8x1xf32, #tpu.memory_space<vmem>>, vector<8x1xf32>,
    %c4_i32 = arith.constant 4 : i32
    %113 = arith.cmpi eq, %arg0, %c4_i32 : i32
    %114 = arith.extui %113 : i1 to i32
    %c0_i32_58 = arith.constant 0 : i32
    %115 = arith.cmpi ne, %114, %c0_i32_58 : i32
    scf.if %115 {
      %c0_59 = arith.constant 0 : index
      %c0_60 = arith.constant 0 : index
      %116 = vector.load %arg7[%c0_59, %c0_60] : memref<8x1xf32, #tpu.memory_space<vmem>>, vector<8x1xf32>
      tpu.vector_store %arg7[%c0_59, %c0_60], %111 {strides = array<i32>} : memref<8x1xf32, #tpu.memory_space<vmem>>, vector<8x1xf32>,
    } else {
    }
    return
  }
  func.func @transform_0(%arg0: i32) -> (i32, i32) {
    %c0_i32 = arith.constant 0 : i32
    %c0_i32_0 = arith.constant 0 : i32
    %c0_i32_1 = arith.constant 0 : i32
    return %c0_i32, %c0_i32_0 : i32, i32
  }
  func.func @transform_1(%arg0: i32) -> (i32, i32, i32) {
    %c0_i32 = arith.constant 0 : i32
    %c0_i32_0 = arith.constant 0 : i32
    %c0_i32_1 = arith.constant 0 : i32
    return %arg0, %c0_i32, %c0_i32_0 : i32, i32, i32
  }
  func.func @transform_2(%arg0: i32) -> (i32, i32, i32, i32) {
    %c0_i32 = arith.constant 0 : i32
    %c0_i32_0 = arith.constant 0 : i32
    %c0_i32_1 = arith.constant 0 : i32
    %c0_i32_2 = arith.constant 0 : i32
    return %arg0, %c0_i32, %c0_i32_0, %c0_i32_1 : i32, i32, i32, i32
  }
  func.func @transform_3(%arg0: i32) -> (i32, i32, i32, i32) {
    %c0_i32 = arith.constant 0 : i32
    %c0_i32_0 = arith.constant 0 : i32
    %c0_i32_1 = arith.constant 0 : i32
    %c0_i32_2 = arith.constant 0 : i32
    return %arg0, %c0_i32, %c0_i32_0, %c0_i32_1 : i32, i32, i32, i32
  }
  func.func @transform_4(%arg0: i32) -> (i32, i32, i32, i32) {
    %c0_i32 = arith.constant 0 : i32
    %c0_i32_0 = arith.constant 0 : i32
    %c0_i32_1 = arith.constant 0 : i32
    %c0_i32_2 = arith.constant 0 : i32
    return %arg0, %c0_i32, %c0_i32_0, %c0_i32_1 : i32, i32, i32, i32
  }
  func.func @transform_5(%arg0: i32) -> (i32, i32, i32, i32) {
    %c0_i32 = arith.constant 0 : i32
    %c0_i32_0 = arith.constant 0 : i32
    %c0_i32_1 = arith.constant 0 : i32
    %c0_i32_2 = arith.constant 0 : i32
    return %arg0, %c0_i32, %c0_i32_0, %c0_i32_1 : i32, i32, i32, i32
  }
  func.func @transform_6(%arg0: i32) -> (i32, i32) {
    %c0_i32 = arith.constant 0 : i32
    %c0_i32_0 = arith.constant 0 : i32
    %c0_i32_1 = arith.constant 0 : i32
    return %c0_i32, %c0_i32_0 : i32, i32
  }
}

</mosaic_0001>

<llo_original>
// kernel: tpu_custom_call.1
$region0: #{tpu_custom_call.1}
  #allocation0 [shape = 'u32[]', space=smem, size = 0x4, offset = 0x4, fixed_abs, tag = 'smem constant byte address 0x4 - core index']
  #allocation1 [shape = 'u32[72,128]{1,0:T(1,128)}', space=vmem, size = 0x9000, scoped, tag = 'internal scratch']
  #allocation2 [shape = 'f32[8,1]{1,0:T(8,128)}', space=vmem, size = 0x1000, scoped, tag = 'scratch operand']
  %s0 = inlined_call_operand.hbm [shape: bf16[8,500], index: 0, kind: input, shape index: {}]
  %s1 = inlined_call_operand.hbm [shape: bf16[5,500,512], index: 1, kind: input, shape index: {}]
  %s2 = inlined_call_operand.hbm [shape: bf16[5,2,256,256], index: 2, kind: input, shape index: {}]
  %s3 = inlined_call_operand.hbm [shape: bf16[5,2,256,256], index: 3, kind: input, shape index: {}]
  %s4 = inlined_call_operand.hbm [shape: bf16[5,2,256,256], index: 4, kind: input, shape index: {}]
  %s5 = inlined_call_operand.vmem [shape: f32[5,2,6,256], index: 5, kind: input, shape index: {}]
  %s6 = inlined_call_operand.vmem [shape: f32[8,1], index: 6, kind: output, shape index: {}]
  %s7 = sld [smem:[#allocation0]]
  $region85: #{tpu_custom_call.1} parent=0
    _
  %s9 = ssub.s32 1, %s7
  %s10 = scalar_select 0, %s9, %s7
  $region1: #{tpu_custom_call.1} parent=0
    #allocation3 [shape = 'u8[8192]{0}', space=vmem, size = 0x2000, scoped, tag = 'input window, operand 0, single buffered']
    #allocation4 [shape = 's32[2]{0}', space=sflag, size = 0x8, scoped, tag = 'scoped memory for tpu_custom_call.1']
    #allocation5 [shape = 'u8[1032192]{0}', space=vmem, size = 0xfc000, scoped, tag = 'input window, operand 1']
    #allocation6 [shape = 's32[2]{0}', space=sflag, size = 0x8, scoped, tag = 'scoped memory for tpu_custom_call.1']
    #allocation7 [shape = 'u8[524288]{0}', space=vmem, size = 0x80000, scoped, tag = 'input window, operand 2']
    #allocation8 [shape = 'u8[524288]{0}', space=vmem, size = 0x80000, scoped, tag = 'input window, operand 3']
    #allocation9 [shape = 's32[2]{0}', space=sflag, size = 0x8, scoped, tag = 'scoped memory for tpu_custom_call.1']
    #allocation10 [shape = 'u8[524288]{0}', space=vmem, size = 0x80000, scoped, tag = 'input window, operand 4']
    %11 = vsyncpa [#allocation4], 0
    %12 = vsyncpa [#allocation6], 0
    %s13 = scalar_lea.sflag [#allocation6], 1
    %14 = vsyncpa %s13, 0
    %15 = vsyncpa [#allocation9], 0
    %s16 = scalar_lea.sflag [#allocation9], 1
    %17 = vsyncpa %s16, 0
    loop: start=0, step=1, limit=7
    $region2: #{tpu_custom_call.1} parent=1 // loop_pre_header
      _
    $region3: #{tpu_custom_call.1} parent=1 // loop_header
      %s19 = sphi 0, %s23
      %p20 = scmp.ge.s32.totalorder %s19, 7
      %s27 = sphi 0, %s27
      %s29 = sphi 0, %s27
      %s30 = sphi 0, %s29
      %s44 = sphi 0, %s30
      %s50 = sphi 0, %s52
      %s53 = sphi 0, %s50
      %s54 = sphi 0, %s53
      %s70 = sphi 0, %s54
      %s76 = sphi 0, %s78
      %s79 = sphi 0, %s76
      %s80 = sphi 0, %s79
      %s96 = sphi 0, %s80
      %s102 = sphi 0, %s104
      %s105 = sphi 0, %s102
      %s106 = sphi 0, %s105
      %s122 = sphi 0, %s106
      %s128 = sphi 0, %s130
      %s131 = sphi 0, %s128
      %s132 = sphi 0, %s131
      %s148 = sphi 0, %s132
      %s154 = sphi 0, %s156
      %s157 = sphi 0, %s154
      %s158 = sphi 0, %s157
      %s174 = sphi 0, %s158
      %s178 = sphi 0, %s178
      %s180 = sphi 0, %s178
      %s181 = sphi 0, %s180
      %s195 = sphi 0, %s181
    $region4: #{tpu_custom_call.1} parent=1 // loop_header_branch
      %22 = sbr.rel (%p20) target = $region8
    $region5: #{tpu_custom_call.1} parent=1 // loop_body
      %s24 = ssub.s32 %s19, 1
      %s25 = ssub.s32 %s19, 2
      %s26 = sadd.s32 %s19, 1
      %s28 = sadd.s32 %s27, 1
      %p31 = scmp.eq.s32.totalorder %s19, 4
      %p32 = scmp.ne.s32.totalorder %s27, %s29
      %p33 = scmp.eq.s32.totalorder %s19, 0
      %p34 = por %p32, %p33
      %p35 = scmp.ne.s32.totalorder %s27, %s29
      %p36 = scmp.eq.s32.totalorder %s24, 4
      %p37 = por %p35, %p36
      %p38 = scmp.ne.s32.totalorder %s29, %s30
      %p39 = scmp.eq.s32.totalorder %s24, 0
      %p40 = por %p38, %p39
      %p41 = scmp.ne.s32.totalorder %s29, %s30
      %p42 = scmp.eq.s32.totalorder %s25, 4
      %p43 = por %p41, %p42
      %p45 = scmp.ne.s32.totalorder %s30, %s44
      %p46 = scmp.eq.s32.totalorder %s25, 0
      %p47 = por %p45, %p46
      %s48 = ssub.s32 %s19, %s26
      %p49 = scmp.eq.s32.totalorder %s48, 0
      %s51 = sadd.s32 %s50, 1
      %s52 = scalar_select %p49, %s50, %s51
      %p55 = pneg %p49
      %p56 = scmp.eq.s32.totalorder %s19, 4
      %p57 = por %p55, %p56
      %p58 = scmp.ne.s32.totalorder %s50, %s53
      %p59 = scmp.eq.s32.totalorder %s19, 0
      %p60 = por %p58, %p59
      %p61 = scmp.ne.s32.totalorder %s50, %s53
      %p62 = scmp.eq.s32.totalorder %s24, 4
      %p63 = por %p61, %p62
      %p64 = scmp.ne.s32.totalorder %s53, %s54
      %p65 = scmp.eq.s32.totalorder %s24, 0
      %p66 = por %p64, %p65
      %p67 = scmp.ne.s32.totalorder %s53, %s54
      %p68 = scmp.eq.s32.totalorder %s25, 4
      %p69 = por %p67, %p68
      %p71 = scmp.ne.s32.totalorder %s54, %s70
      %p72 = scmp.eq.s32.totalorder %s25, 0
      %p73 = por %p71, %p72
      %s74 = ssub.s32 %s19, %s26
      %p75 = scmp.eq.s32.totalorder %s74, 0
      %s77 = sadd.s32 %s76, 1
      %s78 = scalar_select %p75, %s76, %s77
      %p81 = pneg %p75
      %p82 = scmp.eq.s32.totalorder %s19, 4
      %p83 = por %p81, %p82
      %p84 = scmp.ne.s32.totalorder %s76, %s79
      %p85 = scmp.eq.s32.totalorder %s19, 0
      %p86 = por %p84, %p85
      %p87 = scmp.ne.s32.totalorder %s76, %s79
      %p88 = scmp.eq.s32.totalorder %s24, 4
      %p89 = por %p87, %p88
      %p90 = scmp.ne.s32.totalorder %s79, %s80
      %p91 = scmp.eq.s32.totalorder %s24, 0
      %p92 = por %p90, %p91
      %p93 = scmp.ne.s32.totalorder %s79, %s80
      %p94 = scmp.eq.s32.totalorder %s25, 4
      %p95 = por %p93, %p94
      %p97 = scmp.ne.s32.totalorder %s80, %s96
      %p98 = scmp.eq.s32.totalorder %s25, 0
      %p99 = por %p97, %p98
      %s100 = ssub.s32 %s19, %s26
      %p101 = scmp.eq.s32.totalorder %s100, 0
      %s103 = sadd.s32 %s102, 1
      %s104 = scalar_select %p101, %s102, %s103
      %p107 = pneg %p101
      %p108 = scmp.eq.s32.totalorder %s19, 4
      %p109 = por %p107, %p108
      %p110 = scmp.ne.s32.totalorder %s102, %s105
      %p111 = scmp.eq.s32.totalorder %s19, 0
      %p112 = por %p110, %p111
      %p113 = scmp.ne.s32.totalorder %s102, %s105
      %p114 = scmp.eq.s32.totalorder %s24, 4
      %p115 = por %p113, %p114
      %p116 = scmp.ne.s32.totalorder %s105, %s106
      %p117 = scmp.eq.s32.totalorder %s24, 0
      %p118 = por %p116, %p117
      %p119 = scmp.ne.s32.totalorder %s105, %s106
      %p120 = scmp.eq.s32.totalorder %s25, 4
      %p121 = por %p119, %p120
      %p123 = scmp.ne.s32.totalorder %s106, %s122
      %p124 = scmp.eq.s32.totalorder %s25, 0
      %p125 = por %p123, %p124
      %s126 = ssub.s32 %s19, %s26
      %p127 = scmp.eq.s32.totalorder %s126, 0
      %s129 = sadd.s32 %s128, 1
      %s130 = scalar_select %p127, %s128, %s129
      %p133 = pneg %p127
      %p134 = scmp.eq.s32.totalorder %s19, 4
      %p135 = por %p133, %p134
      %p136 = scmp.ne.s32.totalorder %s128, %s131
      %p137 = scmp.eq.s32.totalorder %s19, 0
      %p138 = por %p136, %p137
      %p139 = scmp.ne.s32.totalorder %s128, %s131
      %p140 = scmp.eq.s32.totalorder %s24, 4
      %p141 = por %p139, %p140
      %p142 = scmp.ne.s32.totalorder %s131, %s132
      %p143 = scmp.eq.s32.totalorder %s24, 0
      %p144 = por %p142, %p143
      %p145 = scmp.ne.s32.totalorder %s131, %s132
      %p146 = scmp.eq.s32.totalorder %s25, 4
      %p147 = por %p145, %p146
      %p149 = scmp.ne.s32.totalorder %s132, %s148
      %p150 = scmp.eq.s32.totalorder %s25, 0
      %p151 = por %p149, %p150
      %s152 = ssub.s32 %s19, %s26
      %p153 = scmp.eq.s32.totalorder %s152, 0
      %s155 = sadd.s32 %s154, 1
      %s156 = scalar_select %p153, %s154, %s155
      %p159 = pneg %p153
      %p160 = scmp.eq.s32.totalorder %s19, 4
      %p161 = por %p159, %p160
      %p162 = scmp.ne.s32.totalorder %s154, %s157
      %p163 = scmp.eq.s32.totalorder %s19, 0
      %p164 = por %p162, %p163
      %p165 = scmp.ne.s32.totalorder %s154, %s157
      %p166 = scmp.eq.s32.totalorder %s24, 4
      %p167 = por %p165, %p166
      %p168 = scmp.ne.s32.totalorder %s157, %s158
      %p169 = scmp.eq.s32.totalorder %s24, 0
      %p170 = por %p168, %p169
      %p171 = scmp.ne.s32.totalorder %s157, %s158
      %p172 = scmp.eq.s32.totalorder %s25, 4
      %p173 = por %p171, %p172
      %p175 = scmp.ne.s32.totalorder %s158, %s174
      %p176 = scmp.eq.s32.totalorder %s25, 0
      %p177 = por %p175, %p176
      %s179 = sadd.s32 %s178, 1
      %p182 = scmp.eq.s32.totalorder %s19, 4
      %p183 = scmp.ne.s32.totalorder %s178, %s180
      %p184 = scmp.eq.s32.totalorder %s19, 0
      %p185 = por %p183, %p184
      %p186 = scmp.ne.s32.totalorder %s178, %s180
      %p187 = scmp.eq.s32.totalorder %s24, 4
      %p188 = por %p186, %p187
      %p189 = scmp.ne.s32.totalorder %s180, %s181
      %p190 = scmp.eq.s32.totalorder %s24, 0
      %p191 = por %p189, %p190
      %p192 = scmp.ne.s32.totalorder %s180, %s181
      %p193 = scmp.eq.s32.totalorder %s25, 4
      %p194 = por %p192, %p193
      %p196 = scmp.ne.s32.totalorder %s181, %s195
      %p197 = scmp.eq.s32.totalorder %s25, 0
      %p198 = por %p196, %p197
      %p199 = scmp.le.s32.totalorder 1, %s19
      %p200 = scmp.lt.s32.totalorder %s19, 6
      %p201 = pnand %p199, %p200
      %p202 = pneg %p201
      // Predicated region
      $region9: #{tpu_custom_call.1} parent=5 // pred_check
        _
      $region10: #{tpu_custom_call.1} parent=5 // pred_check_branch
        %204 = sbr.rel (%p201) target = $region12
      $region11: #{tpu_custom_call.1} parent=5 // pred_region
        %s205 = ssub.s32 %s19, 1
        // Predicated region
        $region13: #{tpu_custom_call.1} parent=11 // pred_check
          %p206 = pneg %p40
        $region14: #{tpu_custom_call.1} parent=11 // pred_check_branch
          %208 = sbr.rel (%p206) target = $region16
        $region15: #{tpu_custom_call.1} parent=11 // pred_region
          %210 = vsyncadd [#allocation4], 0
          %s212 = sshll.u32 %s0, 4
          %s213 = int_to_ptr.hbm [resolvable:$true] %s212
          %s214 = sshll.u32 [#allocation3], 4
          %s215 = int_to_ptr.vmem [resolvable:$true] %s214
          %217 = dma.hbm_to_vmem [thread:$0]  %s213, 256, %s215, [#allocation4]
        $region16: #{tpu_custom_call.1} parent=11 // pred_fallthru
          _
      $region12: #{tpu_custom_call.1} parent=5 // pred_fallthru
        _
      %p218 = scmp.lt.s32.totalorder %s19, 5
      // Predicated region
      $region17: #{tpu_custom_call.1} parent=5 // pred_check
        %p219 = pneg %p218
      $region18: #{tpu_custom_call.1} parent=5 // pred_check_branch
        %221 = sbr.rel (%p219) target = $region20
      $region19: #{tpu_custom_call.1} parent=5 // pred_region
        // Predicated region
        $region21: #{tpu_custom_call.1} parent=19 // pred_check
          %p222 = pneg %p60
        $region22: #{tpu_custom_call.1} parent=19 // pred_check_branch
          %224 = sbr.rel (%p222) target = $region24
        $region23: #{tpu_custom_call.1} parent=19 // pred_region
          %s225 = sand.u32 %s19, 1
          %s226 = scalar_lea.sflag [#allocation6], %s225
          %s227 = sand.u32 %s50, 1
          %s228 = smul.addr %s227, 1008
          %s229 = scalar_lea.vmem [#allocation5], %s228
          %231 = vsyncadd %s226, 0
          %s232 = smul.addr %s19, 252
          %s233 = smul.addr %s232, 4
          %s234 = scalar_lea.hbm %s1, %s233
          %s235 = sshll.u32 %s234, 4
          %s236 = int_to_ptr.hbm [resolvable:$true] %s235
          %s237 = sshll.u32 %s229, 4
          %s238 = int_to_ptr.vmem [resolvable:$true] %s237
          %243 = dma.hbm_to_vmem [thread:$0]  %s236, 16128, %s238, %s226, 256, 256, 16
        $region24: #{tpu_custom_call.1} parent=19 // pred_fallthru
          _
        // Predicated region
        $region25: #{tpu_custom_call.1} parent=19 // pred_check
          %p244 = pneg %p86
        $region26: #{tpu_custom_call.1} parent=19 // pred_check_branch
          %246 = sbr.rel (%p244) target = $region28
        $region27: #{tpu_custom_call.1} parent=19 // pred_region
          %s247 = sand.u32 %s19, 1
          %s248 = scalar_lea.sflag [#allocation6], %s247
          %s249 = sand.u32 %s76, 1
          %s250 = smul.addr %s249, 512
          %s251 = scalar_lea.vmem [#allocation7], %s250
          %253 = vsyncadd %s248, 0
          %s254 = smul.addr %s19, 128
          %s255 = smul.addr %s254, 4
          %s256 = scalar_lea.hbm %s2, %s255
          %s257 = sshll.u32 %s256, 4
          %s258 = int_to_ptr.hbm [resolvable:$true] %s257
          %s259 = sshll.u32 %s251, 4
          %s260 = int_to_ptr.vmem [resolvable:$true] %s259
          %265 = dma.hbm_to_vmem [thread:$0]  %s258, 8192, %s260, %s248, 128, 128, 8
        $region28: #{tpu_custom_call.1} parent=19 // pred_fallthru
          _
        // Predicated region
        $region29: #{tpu_custom_call.1} parent=19 // pred_check
          %p266 = pneg %p112
        $region30: #{tpu_custom_call.1} parent=19 // pred_check_branch
          %268 = sbr.rel (%p266) target = $region32
        $region31: #{tpu_custom_call.1} parent=19 // pred_region
          %s269 = sand.u32 %s19, 1
          %s270 = scalar_lea.sflag [#allocation9], %s269
          %s271 = sand.u32 %s102, 1
          %s272 = smul.addr %s271, 512
          %s273 = scalar_lea.vmem [#allocation8], %s272
          %275 = vsyncadd %s270, 0
          %s276 = smul.addr %s19, 128
          %s277 = smul.addr %s276, 4
          %s278 = scalar_lea.hbm %s3, %s277
          %s279 = sshll.u32 %s278, 4
          %s280 = int_to_ptr.hbm [resolvable:$true] %s279
          %s281 = sshll.u32 %s273, 4
          %s282 = int_to_ptr.vmem [resolvable:$true] %s281
          %287 = dma.hbm_to_vmem [thread:$0]  %s280, 8192, %s282, %s270, 128, 128, 8
        $region32: #{tpu_custom_call.1} parent=19 // pred_fallthru
          _
        // Predicated region
        $region33: #{tpu_custom_call.1} parent=19 // pred_check
          %p288 = pneg %p138
        $region34: #{tpu_custom_call.1} parent=19 // pred_check_branch
          %290 = sbr.rel (%p288) target = $region36
        $region35: #{tpu_custom_call.1} parent=19 // pred_region
          %s291 = sand.u32 %s19, 1
          %s292 = scalar_lea.sflag [#allocation9], %s291
          %s293 = sand.u32 %s128, 1
          %s294 = smul.addr %s293, 512
          %s295 = scalar_lea.vmem [#allocation10], %s294
          %297 = vsyncadd %s292, 0
          %s298 = smul.addr %s19, 128
          %s299 = smul.addr %s298, 4
          %s300 = scalar_lea.hbm %s4, %s299
          %s301 = sshll.u32 %s300, 4
          %s302 = int_to_ptr.hbm [resolvable:$true] %s301
          %s303 = sshll.u32 %s295, 4
          %s304 = int_to_ptr.vmem [resolvable:$true] %s303
          %309 = dma.hbm_to_vmem [thread:$0]  %s302, 8192, %s304, %s292, 128, 128, 8
        $region36: #{tpu_custom_call.1} parent=19 // pred_fallthru
          _
        // Predicated region
        $region37: #{tpu_custom_call.1} parent=19 // pred_check
          %p310 = pneg %p164
        $region38: #{tpu_custom_call.1} parent=19 // pred_check_branch
          %312 = sbr.rel (%p310) target = $region40
        $region39: #{tpu_custom_call.1} parent=19 // pred_region
          %p313 = scmp.lt.s32.totalorder %s19, 4
          %s314 = scalar_select %p313, %s19, 4
          %s315 = smul.addr %s314, 4
          %s316 = smul.addr %s315, 8
          %s317 = scalar_lea.vmem %s5, %s316
        $region40: #{tpu_custom_call.1} parent=19 // pred_fallthru
          _
      $region20: #{tpu_custom_call.1} parent=5 // pred_fallthru
        _
      %p318 = scmp.le.s32.totalorder 1, %s19
      %p319 = scmp.lt.s32.totalorder %s19, 6
      %p320 = pnand %p318, %p319
      %p321 = pneg %p320
      // Predicated region
      $region41: #{tpu_custom_call.1} parent=5 // pred_check
        _
      $region42: #{tpu_custom_call.1} parent=5 // pred_check_branch
        %323 = sbr.rel (%p320) target = $region44
      $region43: #{tpu_custom_call.1} parent=5 // pred_region
        %s324 = ssub.s32 %s19, 1
        // Predicated region
        $region45: #{tpu_custom_call.1} parent=43 // pred_check
          %p325 = pneg %p40
        $region46: #{tpu_custom_call.1} parent=43 // pred_check_branch
          %327 = sbr.rel (%p325) target = $region48
        $region47: #{tpu_custom_call.1} parent=43 // pred_region
          %329 = dma.done [#allocation4], 256
        $region48: #{tpu_custom_call.1} parent=43 // pred_fallthru
          _
        %s330 = sand.u32 %s24, 1
        %s331 = scalar_lea.sflag [#allocation6], %s330
        %s332 = sand.u32 %s53, 1
        %s333 = smul.addr %s332, 1008
        %s334 = scalar_lea.vmem [#allocation5], %s333
        // Predicated region
        $region49: #{tpu_custom_call.1} parent=43 // pred_check
          %p335 = pneg %p66
        $region50: #{tpu_custom_call.1} parent=43 // pred_check_branch
          %337 = sbr.rel (%p335) target = $region52
        $region51: #{tpu_custom_call.1} parent=43 // pred_region
          %339 = dma.done %s331, 16128
        $region52: #{tpu_custom_call.1} parent=43 // pred_fallthru
          _
        %s340 = sand.u32 %s24, 1
        %s341 = scalar_lea.sflag [#allocation6], %s340
        %s342 = sand.u32 %s79, 1
        %s343 = smul.addr %s342, 512
        %s344 = scalar_lea.vmem [#allocation7], %s343
        // Predicated region
        $region53: #{tpu_custom_call.1} parent=43 // pred_check
          %p345 = pneg %p92
        $region54: #{tpu_custom_call.1} parent=43 // pred_check_branch
          %347 = sbr.rel (%p345) target = $region56
        $region55: #{tpu_custom_call.1} parent=43 // pred_region
          %349 = dma.done %s341, 8192
        $region56: #{tpu_custom_call.1} parent=43 // pred_fallthru
          _
        %s350 = sand.u32 %s24, 1
        %s351 = scalar_lea.sflag [#allocation9], %s350
        %s352 = sand.u32 %s105, 1
        %s353 = smul.addr %s352, 512
        %s354 = scalar_lea.vmem [#allocation8], %s353
        // Predicated region
        $region57: #{tpu_custom_call.1} parent=43 // pred_check
          %p355 = pneg %p118
        $region58: #{tpu_custom_call.1} parent=43 // pred_check_branch
          %357 = sbr.rel (%p355) target = $region60
        $region59: #{tpu_custom_call.1} parent=43 // pred_region
          %359 = dma.done %s351, 8192
        $region60: #{tpu_custom_call.1} parent=43 // pred_fallthru
          _
        %s360 = sand.u32 %s24, 1
        %s361 = scalar_lea.sflag [#allocation9], %s360
        %s362 = sand.u32 %s131, 1
        %s363 = smul.addr %s362, 512
        %s364 = scalar_lea.vmem [#allocation10], %s363
        // Predicated region
        $region61: #{tpu_custom_call.1} parent=43 // pred_check
          %p365 = pneg %p144
        $region62: #{tpu_custom_call.1} parent=43 // pred_check_branch
          %367 = sbr.rel (%p365) target = $region64
        $region63: #{tpu_custom_call.1} parent=43 // pred_region
          %369 = dma.done %s361, 8192
        $region64: #{tpu_custom_call.1} parent=43 // pred_fallthru
          _
        %p370 = pneg %p40
        %p371 = pneg %p37
        %s372 = sand.u32 %s24, 1
        %s373 = scalar_lea.sflag [#allocation6], %s372
        %s374 = sand.u32 %s53, 1
        %s375 = smul.addr %s374, 1008
        %s376 = scalar_lea.vmem [#allocation5], %s375
        %p377 = pneg %p66
        %p378 = pneg %p63
        %s379 = sand.u32 %s24, 1
        %s380 = scalar_lea.sflag [#allocation6], %s379
        %s381 = sand.u32 %s79, 1
        %s382 = smul.addr %s381, 512
        %s383 = scalar_lea.vmem [#allocation7], %s382
        %p384 = pneg %p92
        %p385 = pneg %p89
        %s386 = sand.u32 %s24, 1
        %s387 = scalar_lea.sflag [#allocation9], %s386
        %s388 = sand.u32 %s105, 1
        %s389 = smul.addr %s388, 512
        %s390 = scalar_lea.vmem [#allocation8], %s389
        %p391 = pneg %p118
        %p392 = pneg %p115
        %s393 = sand.u32 %s24, 1
        %s394 = scalar_lea.sflag [#allocation9], %s393
        %s395 = sand.u32 %s131, 1
        %s396 = smul.addr %s395, 512
        %s397 = scalar_lea.vmem [#allocation10], %s396
        %p398 = pneg %p144
        %p399 = pneg %p141
        %p400 = scmp.lt.s32.totalorder %s24, 4
        %s401 = scalar_select %p400, %s24, 4
        %s402 = smul.addr %s401, 4
        %s403 = smul.addr %s402, 8
        %s404 = scalar_lea.vmem %s5, %s403
        %p405 = pneg %p170
        %p406 = pneg %p167
        %p407 = pneg %p191
        %p408 = pneg %p188
        %p409 = scmp.lt.s32.totalorder %s24, 4
        %s410 = scalar_select %p409, %s24, 4
        %s411 = smul.addr %s410, 4
        %s412 = smul.addr %s411, 8
        %s413 = scalar_lea.vmem %s5, %s412
        %p414 = scmp.eq.s32.totalorder %s24, 0
        // Predicated region
        $region65: #{tpu_custom_call.1} parent=43 // pred_check
          %p415 = pneg %p414
        $region66: #{tpu_custom_call.1} parent=43 // pred_check_branch
          %417 = sbr.rel (%p415) target = $region68
        $region67: #{tpu_custom_call.1} parent=43 // pred_region
          %vm418 = vcmask 7168
          %419 = vst.msk [vmem:[#allocation2] sm:$0xff] %vm418, -inf
        $region68: #{tpu_custom_call.1} parent=43 // pred_fallthru
          _
        %v420 = vld [vmem:[#allocation3] sm:$0xff]
        %v421 = vld [vmem:[#allocation3 + $0x8] sm:$0xff]
        %v422 = vld [vmem:[%s334] sm:$0xff]
        %v423 = vld [vmem:[%s334 + $0x8] sm:$0xff]
        %v424 = vld [vmem:[%s334 + $0x10] sm:$0xff]
        %v425 = vld [vmem:[%s334 + $0x18] sm:$0xff]
        %v426 = vld [vmem:[%s334 + $0x20] sm:$0xff]
        %v427 = vld [vmem:[%s334 + $0x28] sm:$0xff]
        %v428 = vld [vmem:[%s334 + $0x30] sm:$0xff]
        %v429 = vld [vmem:[%s334 + $0x38] sm:$0xff]
        %v430 = vld [vmem:[%s334 + $0x40] sm:$0xff]
        %v431 = vld [vmem:[%s334 + $0x48] sm:$0xff]
        %v432 = vld [vmem:[%s334 + $0x50] sm:$0xff]
        %v433 = vld [vmem:[%s334 + $0x58] sm:$0xff]
        %v434 = vld [vmem:[%s334 + $0x60] sm:$0xff]
        %v435 = vld [vmem:[%s334 + $0x68] sm:$0xff]
        %v436 = vld [vmem:[%s334 + $0x70] sm:$0xff]
        %v437 = vld [vmem:[%s334 + $0x78] sm:$0xff]
        %v438 = vld [vmem:[%s334 + $0x80] sm:$0xff]
        %v439 = vld [vmem:[%s334 + $0x88] sm:$0xff]
        %v440 = vld [vmem:[%s334 + $0x90] sm:$0xff]
        %v441 = vld [vmem:[%s334 + $0x98] sm:$0xff]
        %v442 = vld [vmem:[%s334 + $0xa0] sm:$0xff]
        %v443 = vld [vmem:[%s334 + $0xa8] sm:$0xff]
        %v444 = vld [vmem:[%s334 + $0xb0] sm:$0xff]
        %v445 = vld [vmem:[%s334 + $0xb8] sm:$0xff]
        %v446 = vld [vmem:[%s334 + $0xc0] sm:$0xff]
        %v447 = vld [vmem:[%s334 + $0xc8] sm:$0xff]
        %v448 = vld [vmem:[%s334 + $0xd0] sm:$0xff]
        %v449 = vld [vmem:[%s334 + $0xd8] sm:$0xff]
        %v450 = vld [vmem:[%s334 + $0xe0] sm:$0xff]
        %v451 = vld [vmem:[%s334 + $0xe8] sm:$0xff]
        %v452 = vld [vmem:[%s334 + $0xf0] sm:$0xff]
        %v453 = vld [vmem:[%s334 + $0xf8] sm:$0xff]
        %v454 = vld [vmem:[%s334 + $0x100] sm:$0xff]
        %v455 = vld [vmem:[%s334 + $0x108] sm:$0xff]
        %v456 = vld [vmem:[%s334 + $0x110] sm:$0xff]
        %v457 = vld [vmem:[%s334 + $0x118] sm:$0xff]
        %v458 = vld [vmem:[%s334 + $0x120] sm:$0xff]
        %v459 = vld [vmem:[%s334 + $0x128] sm:$0xff]
        %v460 = vld [vmem:[%s334 + $0x130] sm:$0xff]
        %v461 = vld [vmem:[%s334 + $0x138] sm:$0xff]
        %v462 = vld [vmem:[%s334 + $0x140] sm:$0xff]
        %v463 = vld [vmem:[%s334 + $0x148] sm:$0xff]
        %v464 = vld [vmem:[%s334 + $0x150] sm:$0xff]
        %v465 = vld [vmem:[%s334 + $0x158] sm:$0xff]
        %v466 = vld [vmem:[%s334 + $0x160] sm:$0xff]
        %v467 = vld [vmem:[%s334 + $0x168] sm:$0xff]
        %v468 = vld [vmem:[%s334 + $0x170] sm:$0xff]
        %v469 = vld [vmem:[%s334 + $0x178] sm:$0xff]
        %v470 = vld [vmem:[%s334 + $0x180] sm:$0xff]
        %v471 = vld [vmem:[%s334 + $0x188] sm:$0xff]
        %v472 = vld [vmem:[%s334 + $0x190] sm:$0xff]
        %v473 = vld [vmem:[%s334 + $0x198] sm:$0xff]
        %v474 = vld [vmem:[%s334 + $0x1a0] sm:$0xff]
        %v475 = vld [vmem:[%s334 + $0x1a8] sm:$0xff]
        %v476 = vld [vmem:[%s334 + $0x1b0] sm:$0xff]
        %v477 = vld [vmem:[%s334 + $0x1b8] sm:$0xff]
        %v478 = vld [vmem:[%s334 + $0x1c0] sm:$0xff]
        %v479 = vld [vmem:[%s334 + $0x1c8] sm:$0xff]
        %v480 = vld [vmem:[%s334 + $0x1d0] sm:$0xff]
        %v481 = vld [vmem:[%s334 + $0x1d8] sm:$0xff]
        %v482 = vld [vmem:[%s334 + $0x1e0] sm:$0xff]
        %v483 = vld [vmem:[%s334 + $0x1e8] sm:$0xff]
        %v484 = vld [vmem:[%s334 + $0x1f0] sm:$0xff]
        %v485 = vld [vmem:[%s334 + $0x1f8] sm:$0xff]
        %v486 = vld [vmem:[%s334 + $0x200] sm:$0xff]
        %v487 = vld [vmem:[%s334 + $0x208] sm:$0xff]
        %v488 = vld [vmem:[%s334 + $0x210] sm:$0xff]
        %v489 = vld [vmem:[%s334 + $0x218] sm:$0xff]
        %v490 = vld [vmem:[%s334 + $0x220] sm:$0xff]
        %v491 = vld [vmem:[%s334 + $0x228] sm:$0xff]
        %v492 = vld [vmem:[%s334 + $0x230] sm:$0xff]
        %v493 = vld [vmem:[%s334 + $0x238] sm:$0xff]
        %v494 = vld [vmem:[%s334 + $0x240] sm:$0xff]
        %v495 = vld [vmem:[%s334 + $0x248] sm:$0xff]
        %v496 = vld [vmem:[%s334 + $0x250] sm:$0xff]
        %v497 = vld [vmem:[%s334 + $0x258] sm:$0xff]
        %v498 = vld [vmem:[%s334 + $0x260] sm:$0xff]
        %v499 = vld [vmem:[%s334 + $0x268] sm:$0xff]
        %v500 = vld [vmem:[%s334 + $0x270] sm:$0xff]
        %v501 = vld [vmem:[%s334 + $0x278] sm:$0xff]
        %v502 = vld [vmem:[%s334 + $0x280] sm:$0xff]
        %v503 = vld [vmem:[%s334 + $0x288] sm:$0xff]
        %v504 = vld [vmem:[%s334 + $0x290] sm:$0xff]
        %v505 = vld [vmem:[%s334 + $0x298] sm:$0xff]
        %v506 = vld [vmem:[%s334 + $0x2a0] sm:$0xff]
        %v507 = vld [vmem:[%s334 + $0x2a8] sm:$0xff]
        %v508 = vld [vmem:[%s334 + $0x2b0] sm:$0xff]
        %v509 = vld [vmem:[%s334 + $0x2b8] sm:$0xff]
        %v510 = vld [vmem:[%s334 + $0x2c0] sm:$0xff]
        %v511 = vld [vmem:[%s334 + $0x2c8] sm:$0xff]
        %v512 = vld [vmem:[%s334 + $0x2d0] sm:$0xff]
        %v513 = vld [vmem:[%s334 + $0x2d8] sm:$0xff]
        %v514 = vld [vmem:[%s334 + $0x2e0] sm:$0xff]
        %v515 = vld [vmem:[%s334 + $0x2e8] sm:$0xff]
        %v516 = vld [vmem:[%s334 + $0x2f0] sm:$0xff]
        %v517 = vld [vmem:[%s334 + $0x2f8] sm:$0xff]
        %v518 = vld [vmem:[%s334 + $0x300] sm:$0xff]
        %v519 = vld [vmem:[%s334 + $0x308] sm:$0xff]
        %v520 = vld [vmem:[%s334 + $0x310] sm:$0xff]
        %v521 = vld [vmem:[%s334 + $0x318] sm:$0xff]
        %v522 = vld [vmem:[%s334 + $0x320] sm:$0xff]
        %v523 = vld [vmem:[%s334 + $0x328] sm:$0xff]
        %v524 = vld [vmem:[%s334 + $0x330] sm:$0xff]
        %v525 = vld [vmem:[%s334 + $0x338] sm:$0xff]
        %v526 = vld [vmem:[%s334 + $0x340] sm:$0xff]
        %v527 = vld [vmem:[%s334 + $0x348] sm:$0xff]
        %v528 = vld [vmem:[%s334 + $0x350] sm:$0xff]
        %v529 = vld [vmem:[%s334 + $0x358] sm:$0xff]
        %v530 = vld [vmem:[%s334 + $0x360] sm:$0xff]
        %v531 = vld [vmem:[%s334 + $0x368] sm:$0xff]
        %v532 = vld [vmem:[%s334 + $0x370] sm:$0xff]
        %v533 = vld [vmem:[%s334 + $0x378] sm:$0xff]
        %v534 = vld [vmem:[%s334 + $0x380] sm:$0xff]
        %v535 = vld [vmem:[%s334 + $0x388] sm:$0xff]
        %v536 = vld [vmem:[%s334 + $0x390] sm:$0xff]
        %v537 = vld [vmem:[%s334 + $0x398] sm:$0xff]
        %v538 = vld [vmem:[%s334 + $0x3a0] sm:$0xff]
        %v539 = vld [vmem:[%s334 + $0x3a8] sm:$0xff]
        %v540 = vld [vmem:[%s334 + $0x3b0] sm:$0xff]
        %v541 = vld [vmem:[%s334 + $0x3b8] sm:$0xff]
        %v542 = vld [vmem:[%s334 + $0x3c0] sm:$0xff]
        %v543 = vld [vmem:[%s334 + $0x3c8] sm:$0xff]
        %v544 = vld [vmem:[%s334 + $0x3d0] sm:$0xff]
        %v545 = vld [vmem:[%s334 + $0x3d8] sm:$0xff]
        %v546 = vld [vmem:[%s334 + $0x3e0] sm:$0x33]
        %v547 = vld [vmem:[%s334 + $0x3e8] sm:$0x33]
        %v550 = vunpack.c.l.b16 %v420
        %v551 = vunpack.c.h.b16 %v420
        %v552 = vunpack.c.l.b16 %v421
        %v553 = vunpack.c.h.b16 %v421
        %v554 = vpack.c.b16 %v550, %v550
        %v555 = vpack.c.b16 %v551, %v551
        %v556 = vpack.c.b16 %v552, %v552
        %v557 = vpack.c.b16 %v553, %v553
        %v687 = vunpack.c.l.b16 %v422
        %v688 = vunpack.c.h.b16 %v422
        %v689 = vunpack.c.l.b16 %v423
        %v690 = vunpack.c.h.b16 %v423
        %v691 = vunpack.c.l.b16 %v424
        %v692 = vunpack.c.h.b16 %v424
        %v693 = vunpack.c.l.b16 %v425
        %v694 = vunpack.c.h.b16 %v425
        %v695 = vunpack.c.l.b16 %v426
        %v696 = vunpack.c.h.b16 %v426
        %v697 = vunpack.c.l.b16 %v427
        %v698 = vunpack.c.h.b16 %v427
        %v699 = vunpack.c.l.b16 %v428
        %v700 = vunpack.c.h.b16 %v428
        %v701 = vunpack.c.l.b16 %v429
        %v702 = vunpack.c.h.b16 %v429
        %v703 = vunpack.c.l.b16 %v430
        %v704 = vunpack.c.h.b16 %v430
        %v705 = vunpack.c.l.b16 %v431
        %v706 = vunpack.c.h.b16 %v431
        %v707 = vunpack.c.l.b16 %v432
        %v708 = vunpack.c.h.b16 %v432
        %v709 = vunpack.c.l.b16 %v433
        %v710 = vunpack.c.h.b16 %v433
        %v711 = vunpack.c.l.b16 %v434
        %v712 = vunpack.c.h.b16 %v434
        %v713 = vunpack.c.l.b16 %v435
        %v714 = vunpack.c.h.b16 %v435
        %v715 = vunpack.c.l.b16 %v436
        %v716 = vunpack.c.h.b16 %v436
        %v717 = vunpack.c.l.b16 %v437
        %v718 = vunpack.c.h.b16 %v437
        %v719 = vunpack.c.l.b16 %v438
        %v720 = vunpack.c.h.b16 %v438
        %v721 = vunpack.c.l.b16 %v439
        %v722 = vunpack.c.h.b16 %v439
        %v723 = vunpack.c.l.b16 %v440
        %v724 = vunpack.c.h.b16 %v440
        %v725 = vunpack.c.l.b16 %v441
        %v726 = vunpack.c.h.b16 %v441
        %v727 = vunpack.c.l.b16 %v442
        %v728 = vunpack.c.h.b16 %v442
        %v729 = vunpack.c.l.b16 %v443
        %v730 = vunpack.c.h.b16 %v443
        %v731 = vunpack.c.l.b16 %v444
        %v732 = vunpack.c.h.b16 %v444
        %v733 = vunpack.c.l.b16 %v445
        %v734 = vunpack.c.h.b16 %v445
        %v735 = vunpack.c.l.b16 %v446
        %v736 = vunpack.c.h.b16 %v446
        %v737 = vunpack.c.l.b16 %v447
        %v738 = vunpack.c.h.b16 %v447
        %v739 = vunpack.c.l.b16 %v448
        %v740 = vunpack.c.h.b16 %v448
        %v741 = vunpack.c.l.b16 %v449
        %v742 = vunpack.c.h.b16 %v449
        %v743 = vunpack.c.l.b16 %v450
        %v744 = vunpack.c.h.b16 %v450
        %v745 = vunpack.c.l.b16 %v451
        %v746 = vunpack.c.h.b16 %v451
        %v747 = vunpack.c.l.b16 %v452
        %v748 = vunpack.c.h.b16 %v452
        %v749 = vunpack.c.l.b16 %v453
        %v750 = vunpack.c.h.b16 %v453
        %v751 = vunpack.c.l.b16 %v454
        %v752 = vunpack.c.h.b16 %v454
        %v753 = vunpack.c.l.b16 %v455
        %v754 = vunpack.c.h.b16 %v455
        %v755 = vunpack.c.l.b16 %v456
        %v756 = vunpack.c.h.b16 %v456
        %v757 = vunpack.c.l.b16 %v457
        %v758 = vunpack.c.h.b16 %v457
        %v759 = vunpack.c.l.b16 %v458
        %v760 = vunpack.c.h.b16 %v458
        %v761 = vunpack.c.l.b16 %v459
        %v762 = vunpack.c.h.b16 %v459
        %v763 = vunpack.c.l.b16 %v460
        %v764 = vunpack.c.h.b16 %v460
        %v765 = vunpack.c.l.b16 %v461
        %v766 = vunpack.c.h.b16 %v461
        %v767 = vunpack.c.l.b16 %v462
        %v768 = vunpack.c.h.b16 %v462
        %v769 = vunpack.c.l.b16 %v463
        %v770 = vunpack.c.h.b16 %v463
        %v771 = vunpack.c.l.b16 %v464
        %v772 = vunpack.c.h.b16 %v464
        %v773 = vunpack.c.l.b16 %v465
        %v774 = vunpack.c.h.b16 %v465
        %v775 = vunpack.c.l.b16 %v466
        %v776 = vunpack.c.h.b16 %v466
        %v777 = vunpack.c.l.b16 %v467
        %v778 = vunpack.c.h.b16 %v467
        %v779 = vunpack.c.l.b16 %v468
        %v780 = vunpack.c.h.b16 %v468
        %v781 = vunpack.c.l.b16 %v469
        %v782 = vunpack.c.h.b16 %v469
        %v783 = vunpack.c.l.b16 %v470
        %v784 = vunpack.c.h.b16 %v470
        %v785 = vunpack.c.l.b16 %v471
        %v786 = vunpack.c.h.b16 %v471
        %v787 = vunpack.c.l.b16 %v472
        %v788 = vunpack.c.h.b16 %v472
        %v789 = vunpack.c.l.b16 %v473
        %v790 = vunpack.c.h.b16 %v473
        %v791 = vunpack.c.l.b16 %v474
        %v792 = vunpack.c.h.b16 %v474
        %v793 = vunpack.c.l.b16 %v475
        %v794 = vunpack.c.h.b16 %v475
        %v795 = vunpack.c.l.b16 %v476
        %v796 = vunpack.c.h.b16 %v476
        %v797 = vunpack.c.l.b16 %v477
        %v798 = vunpack.c.h.b16 %v477
        %v799 = vunpack.c.l.b16 %v478
        %v800 = vunpack.c.h.b16 %v478
        %v801 = vunpack.c.l.b16 %v479
        %v802 = vunpack.c.h.b16 %v479
        %v803 = vunpack.c.l.b16 %v480
        %v804 = vunpack.c.h.b16 %v480
        %v805 = vunpack.c.l.b16 %v481
        %v806 = vunpack.c.h.b16 %v481
        %v807 = vunpack.c.l.b16 %v482
        %v808 = vunpack.c.h.b16 %v482
        %v809 = vunpack.c.l.b16 %v483
        %v810 = vunpack.c.h.b16 %v483
        %v811 = vunpack.c.l.b16 %v484
        %v812 = vunpack.c.h.b16 %v484
        %v813 = vunpack.c.l.b16 %v485
        %v814 = vunpack.c.h.b16 %v485
        %v815 = vunpack.c.l.b16 %v486
        %v816 = vunpack.c.h.b16 %v486
        %v817 = vunpack.c.l.b16 %v487
        %v818 = vunpack.c.h.b16 %v487
        %v819 = vunpack.c.l.b16 %v488
        %v820 = vunpack.c.h.b16 %v488
        %v821 = vunpack.c.l.b16 %v489
        %v822 = vunpack.c.h.b16 %v489
        %v823 = vunpack.c.l.b16 %v490
        %v824 = vunpack.c.h.b16 %v490
        %v825 = vunpack.c.l.b16 %v491
        %v826 = vunpack.c.h.b16 %v491
        %v827 = vunpack.c.l.b16 %v492
        %v828 = vunpack.c.h.b16 %v492
        %v829 = vunpack.c.l.b16 %v493
        %v830 = vunpack.c.h.b16 %v493
        %v831 = vunpack.c.l.b16 %v494
        %v832 = vunpack.c.h.b16 %v494
        %v833 = vunpack.c.l.b16 %v495
        %v834 = vunpack.c.h.b16 %v495
        %v835 = vunpack.c.l.b16 %v496
        %v836 = vunpack.c.h.b16 %v496
        %v837 = vunpack.c.l.b16 %v497
        %v838 = vunpack.c.h.b16 %v497
        %v839 = vunpack.c.l.b16 %v498
        %v840 = vunpack.c.h.b16 %v498
        %v841 = vunpack.c.l.b16 %v499
        %v842 = vunpack.c.h.b16 %v499
        %v843 = vunpack.c.l.b16 %v500
        %v844 = vunpack.c.h.b16 %v500
        %v845 = vunpack.c.l.b16 %v501
        %v846 = vunpack.c.h.b16 %v501
        %v847 = vunpack.c.l.b16 %v502
        %v848 = vunpack.c.h.b16 %v502
        %v849 = vunpack.c.l.b16 %v503
        %v850 = vunpack.c.h.b16 %v503
        %v851 = vunpack.c.l.b16 %v504
        %v852 = vunpack.c.h.b16 %v504
        %v853 = vunpack.c.l.b16 %v505
        %v854 = vunpack.c.h.b16 %v505
        %v855 = vunpack.c.l.b16 %v506
        %v856 = vunpack.c.h.b16 %v506
        %v857 = vunpack.c.l.b16 %v507
        %v858 = vunpack.c.h.b16 %v507
        %v859 = vunpack.c.l.b16 %v508
        %v860 = vunpack.c.h.b16 %v508
        %v861 = vunpack.c.l.b16 %v509
        %v862 = vunpack.c.h.b16 %v509
        %v863 = vunpack.c.l.b16 %v510
        %v864 = vunpack.c.h.b16 %v510
        %v865 = vunpack.c.l.b16 %v511
        %v866 = vunpack.c.h.b16 %v511
        %v867 = vunpack.c.l.b16 %v512
        %v868 = vunpack.c.h.b16 %v512
        %v869 = vunpack.c.l.b16 %v513
        %v870 = vunpack.c.h.b16 %v513
        %v871 = vunpack.c.l.b16 %v514
        %v872 = vunpack.c.h.b16 %v514
        %v873 = vunpack.c.l.b16 %v515
        %v874 = vunpack.c.h.b16 %v515
        %v875 = vunpack.c.l.b16 %v516
        %v876 = vunpack.c.h.b16 %v516
        %v877 = vunpack.c.l.b16 %v517
        %v878 = vunpack.c.h.b16 %v517
        %v879 = vunpack.c.l.b16 %v518
        %v880 = vunpack.c.h.b16 %v518
        %v881 = vunpack.c.l.b16 %v519
        %v882 = vunpack.c.h.b16 %v519
        %v883 = vunpack.c.l.b16 %v520
        %v884 = vunpack.c.h.b16 %v520
        %v885 = vunpack.c.l.b16 %v521
        %v886 = vunpack.c.h.b16 %v521
        %v887 = vunpack.c.l.b16 %v522
        %v888 = vunpack.c.h.b16 %v522
        %v889 = vunpack.c.l.b16 %v523
        %v890 = vunpack.c.h.b16 %v523
        %v891 = vunpack.c.l.b16 %v524
        %v892 = vunpack.c.h.b16 %v524
        %v893 = vunpack.c.l.b16 %v525
        %v894 = vunpack.c.h.b16 %v525
        %v895 = vunpack.c.l.b16 %v526
        %v896 = vunpack.c.h.b16 %v526
        %v897 = vunpack.c.l.b16 %v527
        %v898 = vunpack.c.h.b16 %v527
        %v899 = vunpack.c.l.b16 %v528
        %v900 = vunpack.c.h.b16 %v528
        %v901 = vunpack.c.l.b16 %v529
        %v902 = vunpack.c.h.b16 %v529
        %v903 = vunpack.c.l.b16 %v530
        %v904 = vunpack.c.h.b16 %v530
        %v905 = vunpack.c.l.b16 %v531
        %v906 = vunpack.c.h.b16 %v531
        %v907 = vunpack.c.l.b16 %v532
        %v908 = vunpack.c.h.b16 %v532
        %v909 = vunpack.c.l.b16 %v533
        %v910 = vunpack.c.h.b16 %v533
        %v911 = vunpack.c.l.b16 %v534
        %v912 = vunpack.c.h.b16 %v534
        %v913 = vunpack.c.l.b16 %v535
        %v914 = vunpack.c.h.b16 %v535
        %v915 = vunpack.c.l.b16 %v536
        %v916 = vunpack.c.h.b16 %v536
        %v917 = vunpack.c.l.b16 %v537
        %v918 = vunpack.c.h.b16 %v537
        %v919 = vunpack.c.l.b16 %v538
        %v920 = vunpack.c.h.b16 %v538
        %v921 = vunpack.c.l.b16 %v539
        %v922 = vunpack.c.h.b16 %v539
        %v923 = vunpack.c.l.b16 %v540
        %v924 = vunpack.c.h.b16 %v540
        %v925 = vunpack.c.l.b16 %v541
        %v926 = vunpack.c.h.b16 %v541
        %v927 = vunpack.c.l.b16 %v542
        %v928 = vunpack.c.h.b16 %v542
        %v929 = vunpack.c.l.b16 %v543
        %v930 = vunpack.c.h.b16 %v543
        %v931 = vunpack.c.l.b16 %v544
        %v932 = vunpack.c.h.b16 %v544
        %v933 = vunpack.c.l.b16 %v545
        %v934 = vunpack.c.h.b16 %v545
        %v935 = vunpack.c.l.b16 %v546
        %v936 = vunpack.c.h.b16 %v546
        %v937 = vunpack.c.l.b16 %v547
        %v938 = vunpack.c.h.b16 %v547
        %v939 = vpack.c.b16 %v691, %v687
        %v940 = vpack.c.b16 %v692, %v688
        %v941 = vpack.c.b16 %v693, %v689
        %v942 = vpack.c.b16 %v694, %v690
        %v943 = vpack.c.b16 %v699, %v695
        %v944 = vpack.c.b16 %v700, %v696
        %v945 = vpack.c.b16 %v701, %v697
        %v946 = vpack.c.b16 %v702, %v698
        %v947 = vpack.c.b16 %v707, %v703
        %v948 = vpack.c.b16 %v708, %v704
        %v949 = vpack.c.b16 %v709, %v705
        %v950 = vpack.c.b16 %v710, %v706
        %v951 = vpack.c.b16 %v715, %v711
        %v952 = vpack.c.b16 %v716, %v712
        %v953 = vpack.c.b16 %v717, %v713
        %v954 = vpack.c.b16 %v718, %v714
        %v955 = vpack.c.b16 %v723, %v719
        %v956 = vpack.c.b16 %v724, %v720
        %v957 = vpack.c.b16 %v725, %v721
        %v958 = vpack.c.b16 %v726, %v722
        %v959 = vpack.c.b16 %v731, %v727
        %v960 = vpack.c.b16 %v732, %v728
        %v961 = vpack.c.b16 %v733, %v729
        %v962 = vpack.c.b16 %v734, %v730
        %v963 = vpack.c.b16 %v739, %v735
        %v964 = vpack.c.b16 %v740, %v736
        %v965 = vpack.c.b16 %v741, %v737
        %v966 = vpack.c.b16 %v742, %v738
        %v967 = vpack.c.b16 %v747, %v743
        %v968 = vpack.c.b16 %v748, %v744
        %v969 = vpack.c.b16 %v749, %v745
        %v970 = vpack.c.b16 %v750, %v746
        %v971 = vpack.c.b16 %v755, %v751
        %v972 = vpack.c.b16 %v756, %v752
        %v973 = vpack.c.b16 %v757, %v753
        %v974 = vpack.c.b16 %v758, %v754
        %v975 = vpack.c.b16 %v763, %v759
        %v976 = vpack.c.b16 %v764, %v760
        %v977 = vpack.c.b16 %v765, %v761
        %v978 = vpack.c.b16 %v766, %v762
        %v979 = vpack.c.b16 %v771, %v767
        %v980 = vpack.c.b16 %v772, %v768
        %v981 = vpack.c.b16 %v773, %v769
        %v982 = vpack.c.b16 %v774, %v770
        %v983 = vpack.c.b16 %v779, %v775
        %v984 = vpack.c.b16 %v780, %v776
        %v985 = vpack.c.b16 %v781, %v777
        %v986 = vpack.c.b16 %v782, %v778
        %v987 = vpack.c.b16 %v787, %v783
        %v988 = vpack.c.b16 %v788, %v784
        %v989 = vpack.c.b16 %v789, %v785
        %v990 = vpack.c.b16 %v790, %v786
        %v991 = vpack.c.b16 %v795, %v791
        %v992 = vpack.c.b16 %v796, %v792
        %v993 = vpack.c.b16 %v797, %v793
        %v994 = vpack.c.b16 %v798, %v794
        %v995 = vpack.c.b16 %v803, %v799
        %v996 = vpack.c.b16 %v804, %v800
        %v997 = vpack.c.b16 %v805, %v801
        %v998 = vpack.c.b16 %v806, %v802
        %v999 = vpack.c.b16 %v811, %v807
        %v1000 = vpack.c.b16 %v812, %v808
        %v1001 = vpack.c.b16 %v813, %v809
        %v1002 = vpack.c.b16 %v814, %v810
        %v1003 = vpack.c.b16 %v819, %v815
        %v1004 = vpack.c.b16 %v820, %v816
        %v1005 = vpack.c.b16 %v821, %v817
        %v1006 = vpack.c.b16 %v822, %v818
        %v1007 = vpack.c.b16 %v827, %v823
        %v1008 = vpack.c.b16 %v828, %v824
        %v1009 = vpack.c.b16 %v829, %v825
        %v1010 = vpack.c.b16 %v830, %v826
        %v1011 = vpack.c.b16 %v835, %v831
        %v1012 = vpack.c.b16 %v836, %v832
        %v1013 = vpack.c.b16 %v837, %v833
        %v1014 = vpack.c.b16 %v838, %v834
        %v1015 = vpack.c.b16 %v843, %v839
        %v1016 = vpack.c.b16 %v844, %v840
        %v1017 = vpack.c.b16 %v845, %v841
        %v1018 = vpack.c.b16 %v846, %v842
        %v1019 = vpack.c.b16 %v851, %v847
        %v1020 = vpack.c.b16 %v852, %v848
        %v1021 = vpack.c.b16 %v853, %v849
        %v1022 = vpack.c.b16 %v854, %v850
        %v1023 = vpack.c.b16 %v859, %v855
        %v1024 = vpack.c.b16 %v860, %v856
        %v1025 = vpack.c.b16 %v861, %v857
        %v1026 = vpack.c.b16 %v862, %v858
        %v1027 = vpack.c.b16 %v867, %v863
        %v1028 = vpack.c.b16 %v868, %v864
        %v1029 = vpack.c.b16 %v869, %v865
        %v1030 = vpack.c.b16 %v870, %v866
        %v1031 = vpack.c.b16 %v875, %v871
        %v1032 = vpack.c.b16 %v876, %v872
        %v1033 = vpack.c.b16 %v877, %v873
        %v1034 = vpack.c.b16 %v878, %v874
        %v1035 = vpack.c.b16 %v883, %v879
        %v1036 = vpack.c.b16 %v884, %v880
        %v1037 = vpack.c.b16 %v885, %v881
        %v1038 = vpack.c.b16 %v886, %v882
        %v1039 = vpack.c.b16 %v891, %v887
        %v1040 = vpack.c.b16 %v892, %v888
        %v1041 = vpack.c.b16 %v893, %v889
        %v1042 = vpack.c.b16 %v894, %v890
        %v1043 = vpack.c.b16 %v899, %v895
        %v1044 = vpack.c.b16 %v900, %v896
        %v1045 = vpack.c.b16 %v901, %v897
        %v1046 = vpack.c.b16 %v902, %v898
        %v1047 = vpack.c.b16 %v907, %v903
        %v1048 = vpack.c.b16 %v908, %v904
        %v1049 = vpack.c.b16 %v909, %v905
        %v1050 = vpack.c.b16 %v910, %v906
        %v1051 = vpack.c.b16 %v915, %v911
        %v1052 = vpack.c.b16 %v916, %v912
        %v1053 = vpack.c.b16 %v917, %v913
        %v1054 = vpack.c.b16 %v918, %v914
        %v1055 = vpack.c.b16 %v923, %v919
        %v1056 = vpack.c.b16 %v924, %v920
        %v1057 = vpack.c.b16 %v925, %v921
        %v1058 = vpack.c.b16 %v926, %v922
        %v1059 = vpack.c.b16 %v931, %v927
        %v1060 = vpack.c.b16 %v932, %v928
        %v1061 = vpack.c.b16 %v933, %v929
        %v1062 = vpack.c.b16 %v934, %v930
        %v1063 = vpack.c.b16 %v935, %v935
        %v1064 = vpack.c.b16 %v936, %v936
        %v1065 = vpack.c.b16 %v937, %v937
        %v1066 = vpack.c.b16 %v938, %v938
        %vm1191 = vcmask 949248
        %v1193 = vsel %vm1191, %v557, 0
        %vm1195 = vcmask 1041408
        %v1197 = vsel %vm1195, %v1063, 0
        %v1200 = vsel %vm1195, %v1064, 0
        %v1203 = vsel %vm1195, %v1065, 0
        %v1206 = vsel %vm1195, %v1066, 0
        %1208 = vmatpush.bf16.msra.mxu0 %v967
        %1209 = vmatpush.bf16.msra.mxu0 %v963
        %1210 = vmatpush.bf16.msra.mxu0 %v959
        %1211 = vmatpush.bf16.msra.mxu0 %v955
        %1212 = vmatpush.bf16.msra.mxu0 %v951
        %1213 = vmatpush.bf16.msra.mxu0 %v947
        %1214 = vmatpush.bf16.msra.mxu0 %v943
        %1215 = vmatpush.bf16.msra.mxu0 %v939
        %1216 = vmatmul.bf16.gmra.mxu0 %v554
        %v1217 = vpop.f32.mrf.mxu0
        %v1218 = vadd.f32 0.0, %v1217
        %v1219 = vpop.f32.mrf.mxu0
        %1220 = vdwg.mxu0
        %1221 = vmatpush.bf16.msra.mxu0 %v999
        %1222 = vmatpush.bf16.msra.mxu0 %v995
        %1223 = vmatpush.bf16.msra.mxu0 %v991
        %1224 = vmatpush.bf16.msra.mxu0 %v987
        %1225 = vmatpush.bf16.msra.mxu0 %v983
        %1226 = vmatpush.bf16.msra.mxu0 %v979
        %1227 = vmatpush.bf16.msra.mxu0 %v975
        %1228 = vmatpush.bf16.msra.mxu0 %v971
        %1229 = vmatmul.bf16.gmra.mxu0 %v555
        %v1230 = vpop.f32.mrf.mxu0
        %v1231 = vadd.f32 %v1218, %v1230
        %v1232 = vpop.f32.mrf.mxu0
        %1233 = vdwg.mxu0
        %1234 = vmatpush.bf16.msra.mxu0 %v1031
        %1235 = vmatpush.bf16.msra.mxu0 %v1027
        %1236 = vmatpush.bf16.msra.mxu0 %v1023
        %1237 = vmatpush.bf16.msra.mxu0 %v1019
        %1238 = vmatpush.bf16.msra.mxu0 %v1015
        %1239 = vmatpush.bf16.msra.mxu0 %v1011
        %1240 = vmatpush.bf16.msra.mxu0 %v1007
        %1241 = vmatpush.bf16.msra.mxu0 %v1003
        %1242 = vmatmul.bf16.gmra.mxu0 %v556
        %v1243 = vpop.f32.mrf.mxu0
        %v1244 = vadd.f32 %v1231, %v1243
        %v1245 = vpop.f32.mrf.mxu0
        %1246 = vdwg.mxu0
        %1247 = vmatpush.bf16.msra.mxu0 %v1197
        %1248 = vmatpush.bf16.msra.mxu0 %v1059
        %1249 = vmatpush.bf16.msra.mxu0 %v1055
        %1250 = vmatpush.bf16.msra.mxu0 %v1051
        %1251 = vmatpush.bf16.msra.mxu0 %v1047
        %1252 = vmatpush.bf16.msra.mxu0 %v1043
        %1253 = vmatpush.bf16.msra.mxu0 %v1039
        %1254 = vmatpush.bf16.msra.mxu0 %v1035
        %1255 = vmatmul.bf16.gmra.mxu0 %v1193
        %v1256 = vpop.f32.mrf.mxu0
        %v1257 = vadd.f32 %v1244, %v1256
        %v1258 = vpop.f32.mrf.mxu0
        %1259 = vdwg.mxu0
        %1260 = vmatpush.bf16.msra.mxu0 %v968
        %1261 = vmatpush.bf16.msra.mxu0 %v964
        %1262 = vmatpush.bf16.msra.mxu0 %v960
        %1263 = vmatpush.bf16.msra.mxu0 %v956
        %1264 = vmatpush.bf16.msra.mxu0 %v952
        %1265 = vmatpush.bf16.msra.mxu0 %v948
        %1266 = vmatpush.bf16.msra.mxu0 %v944
        %1267 = vmatpush.bf16.msra.mxu0 %v940
        %1268 = vmatmul.bf16.gmra.mxu0 %v554
        %v1269 = vpop.f32.mrf.mxu0
        %v1270 = vadd.f32 0.0, %v1269
        %v1271 = vpop.f32.mrf.mxu0
        %1272 = vdwg.mxu0
        %1273 = vmatpush.bf16.msra.mxu0 %v1000
        %1274 = vmatpush.bf16.msra.mxu0 %v996
        %1275 = vmatpush.bf16.msra.mxu0 %v992
        %1276 = vmatpush.bf16.msra.mxu0 %v988
        %1277 = vmatpush.bf16.msra.mxu0 %v984
        %1278 = vmatpush.bf16.msra.mxu0 %v980
        %1279 = vmatpush.bf16.msra.mxu0 %v976
        %1280 = vmatpush.bf16.msra.mxu0 %v972
        %1281 = vmatmul.bf16.gmra.mxu0 %v555
        %v1282 = vpop.f32.mrf.mxu0
        %v1283 = vadd.f32 %v1270, %v1282
        %v1284 = vpop.f32.mrf.mxu0
        %1285 = vdwg.mxu0
        %1286 = vmatpush.bf16.msra.mxu0 %v1032
        %1287 = vmatpush.bf16.msra.mxu0 %v1028
        %1288 = vmatpush.bf16.msra.mxu0 %v1024
        %1289 = vmatpush.bf16.msra.mxu0 %v1020
        %1290 = vmatpush.bf16.msra.mxu0 %v1016
        %1291 = vmatpush.bf16.msra.mxu0 %v1012
        %1292 = vmatpush.bf16.msra.mxu0 %v1008
        %1293 = vmatpush.bf16.msra.mxu0 %v1004
        %1294 = vmatmul.bf16.gmra.mxu0 %v556
        %v1295 = vpop.f32.mrf.mxu0
        %v1296 = vadd.f32 %v1283, %v1295
        %v1297 = vpop.f32.mrf.mxu0
        %1298 = vdwg.mxu0
        %1299 = vmatpush.bf16.msra.mxu0 %v1200
        %1300 = vmatpush.bf16.msra.mxu0 %v1060
        %1301 = vmatpush.bf16.msra.mxu0 %v1056
        %1302 = vmatpush.bf16.msra.mxu0 %v1052
        %1303 = vmatpush.bf16.msra.mxu0 %v1048
        %1304 = vmatpush.bf16.msra.mxu0 %v1044
        %1305 = vmatpush.bf16.msra.mxu0 %v1040
        %1306 = vmatpush.bf16.msra.mxu0 %v1036
        %1307 = vmatmul.bf16.gmra.mxu0 %v1193
        %v1308 = vpop.f32.mrf.mxu0
        %v1309 = vadd.f32 %v1296, %v1308
        %v1310 = vpop.f32.mrf.mxu0
        %1311 = vdwg.mxu0
        %1312 = vmatpush.bf16.msra.mxu0 %v969
        %1313 = vmatpush.bf16.msra.mxu0 %v965
        %1314 = vmatpush.bf16.msra.mxu0 %v961
        %1315 = vmatpush.bf16.msra.mxu0 %v957
        %1316 = vmatpush.bf16.msra.mxu0 %v953
        %1317 = vmatpush.bf16.msra.mxu0 %v949
        %1318 = vmatpush.bf16.msra.mxu0 %v945
        %1319 = vmatpush.bf16.msra.mxu0 %v941
        %1320 = vmatmul.bf16.gmra.mxu0 %v554
        %v1321 = vpop.f32.mrf.mxu0
        %v1322 = vadd.f32 0.0, %v1321
        %v1323 = vpop.f32.mrf.mxu0
        %1324 = vdwg.mxu0
        %1325 = vmatpush.bf16.msra.mxu0 %v1001
        %1326 = vmatpush.bf16.msra.mxu0 %v997
        %1327 = vmatpush.bf16.msra.mxu0 %v993
        %1328 = vmatpush.bf16.msra.mxu0 %v989
        %1329 = vmatpush.bf16.msra.mxu0 %v985
        %1330 = vmatpush.bf16.msra.mxu0 %v981
        %1331 = vmatpush.bf16.msra.mxu0 %v977
        %1332 = vmatpush.bf16.msra.mxu0 %v973
        %1333 = vmatmul.bf16.gmra.mxu0 %v555
        %v1334 = vpop.f32.mrf.mxu0
        %v1335 = vadd.f32 %v1322, %v1334
        %v1336 = vpop.f32.mrf.mxu0
        %1337 = vdwg.mxu0
        %1338 = vmatpush.bf16.msra.mxu0 %v1033
        %1339 = vmatpush.bf16.msra.mxu0 %v1029
        %1340 = vmatpush.bf16.msra.mxu0 %v1025
        %1341 = vmatpush.bf16.msra.mxu0 %v1021
        %1342 = vmatpush.bf16.msra.mxu0 %v1017
        %1343 = vmatpush.bf16.msra.mxu0 %v1013
        %1344 = vmatpush.bf16.msra.mxu0 %v1009
        %1345 = vmatpush.bf16.msra.mxu0 %v1005
        %1346 = vmatmul.bf16.gmra.mxu0 %v556
        %v1347 = vpop.f32.mrf.mxu0
        %v1348 = vadd.f32 %v1335, %v1347
        %v1349 = vpop.f32.mrf.mxu0
        %1350 = vdwg.mxu0
        %1351 = vmatpush.bf16.msra.mxu0 %v1203
        %1352 = vmatpush.bf16.msra.mxu0 %v1061
        %1353 = vmatpush.bf16.msra.mxu0 %v1057
        %1354 = vmatpush.bf16.msra.mxu0 %v1053
        %1355 = vmatpush.bf16.msra.mxu0 %v1049
        %1356 = vmatpush.bf16.msra.mxu0 %v1045
        %1357 = vmatpush.bf16.msra.mxu0 %v1041
        %1358 = vmatpush.bf16.msra.mxu0 %v1037
        %1359 = vmatmul.bf16.gmra.mxu0 %v1193
        %v1360 = vpop.f32.mrf.mxu0
        %v1361 = vadd.f32 %v1348, %v1360
        %v1362 = vpop.f32.mrf.mxu0
        %1363 = vdwg.mxu0
        %1364 = vmatpush.bf16.msra.mxu0 %v970
        %1365 = vmatpush.bf16.msra.mxu0 %v966
        %1366 = vmatpush.bf16.msra.mxu0 %v962
        %1367 = vmatpush.bf16.msra.mxu0 %v958
        %1368 = vmatpush.bf16.msra.mxu0 %v954
        %1369 = vmatpush.bf16.msra.mxu0 %v950
        %1370 = vmatpush.bf16.msra.mxu0 %v946
        %1371 = vmatpush.bf16.msra.mxu0 %v942
        %1372 = vmatmul.bf16.gmra.mxu0 %v554
        %v1373 = vpop.f32.mrf.mxu0
        %v1374 = vadd.f32 0.0, %v1373
        %v1375 = vpop.f32.mrf.mxu0
        %1376 = vdwg.mxu0
        %1377 = vmatpush.bf16.msra.mxu0 %v1002
        %1378 = vmatpush.bf16.msra.mxu0 %v998
        %1379 = vmatpush.bf16.msra.mxu0 %v994
        %1380 = vmatpush.bf16.msra.mxu0 %v990
        %1381 = vmatpush.bf16.msra.mxu0 %v986
        %1382 = vmatpush.bf16.msra.mxu0 %v982
        %1383 = vmatpush.bf16.msra.mxu0 %v978
        %1384 = vmatpush.bf16.msra.mxu0 %v974
        %1385 = vmatmul.bf16.gmra.mxu0 %v555
        %v1386 = vpop.f32.mrf.mxu0
        %v1387 = vadd.f32 %v1374, %v1386
        %v1388 = vpop.f32.mrf.mxu0
        %1389 = vdwg.mxu0
        %1390 = vmatpush.bf16.msra.mxu0 %v1034
        %1391 = vmatpush.bf16.msra.mxu0 %v1030
        %1392 = vmatpush.bf16.msra.mxu0 %v1026
        %1393 = vmatpush.bf16.msra.mxu0 %v1022
        %1394 = vmatpush.bf16.msra.mxu0 %v1018
        %1395 = vmatpush.bf16.msra.mxu0 %v1014
        %1396 = vmatpush.bf16.msra.mxu0 %v1010
        %1397 = vmatpush.bf16.msra.mxu0 %v1006
        %1398 = vmatmul.bf16.gmra.mxu0 %v556
        %v1399 = vpop.f32.mrf.mxu0
        %v1400 = vadd.f32 %v1387, %v1399
        %v1401 = vpop.f32.mrf.mxu0
        %1402 = vdwg.mxu0
        %1403 = vmatpush.bf16.msra.mxu0 %v1206
        %1404 = vmatpush.bf16.msra.mxu0 %v1062
        %1405 = vmatpush.bf16.msra.mxu0 %v1058
        %1406 = vmatpush.bf16.msra.mxu0 %v1054
        %1407 = vmatpush.bf16.msra.mxu0 %v1050
        %1408 = vmatpush.bf16.msra.mxu0 %v1046
        %1409 = vmatpush.bf16.msra.mxu0 %v1042
        %1410 = vmatpush.bf16.msra.mxu0 %v1038
        %1411 = vmatmul.bf16.gmra.mxu0 %v1193
        %v1412 = vpop.f32.mrf.mxu0
        %v1413 = vadd.f32 %v1400, %v1412
        %v1414 = vpop.f32.mrf.mxu0
        %1415 = vdwg.mxu0
        %v1416 = vld [vmem:[#allocation2] sm:$0xff]
        %v1417 = vld [vmem:[%s413] sm:$0x3f]
        %v1418 = vld [vmem:[%s413 + $0x8] sm:$0x3f]
        %v1419 = vperm.slane %v1417, 0
        %v1420 = vperm.slane %v1418, 0
        %v1421 = vadd.f32 %v1257, %v1419
        %v1422 = vadd.f32 %v1309, %v1420
        %v1423 = vmax.f32 %v1421, 0.0
        %v1424 = vmax.f32 %v1422, 0.0
        %v1425 = vpack.c.bf16 %v1423, %v1423
        %v1426 = vpack.c.bf16 %v1424, %v1424
        %v1427 = vld [vmem:[%s344] sm:$0xff]
        %v1428 = vld [vmem:[%s344 + $0x8] sm:$0xff]
        %v1429 = vld [vmem:[%s344 + $0x10] sm:$0xff]
        %v1430 = vld [vmem:[%s344 + $0x18] sm:$0xff]
        %v1431 = vld [vmem:[%s344 + $0x20] sm:$0xff]
        %v1432 = vld [vmem:[%s344 + $0x28] sm:$0xff]
        %v1433 = vld [vmem:[%s344 + $0x30] sm:$0xff]
        %v1434 = vld [vmem:[%s344 + $0x38] sm:$0xff]
        %v1435 = vld [vmem:[%s344 + $0x40] sm:$0xff]
        %v1436 = vld [vmem:[%s344 + $0x48] sm:$0xff]
        %v1437 = vld [vmem:[%s344 + $0x50] sm:$0xff]
        %v1438 = vld [vmem:[%s344 + $0x58] sm:$0xff]
        %v1439 = vld [vmem:[%s344 + $0x60] sm:$0xff]
        %v1440 = vld [vmem:[%s344 + $0x68] sm:$0xff]
        %v1441 = vld [vmem:[%s344 + $0x70] sm:$0xff]
        %v1442 = vld [vmem:[%s344 + $0x78] sm:$0xff]
        %v1443 = vld [vmem:[%s344 + $0x80] sm:$0xff]
        %v1444 = vld [vmem:[%s344 + $0x88] sm:$0xff]
        %v1445 = vld [vmem:[%s344 + $0x90] sm:$0xff]
        %v1446 = vld [vmem:[%s344 + $0x98] sm:$0xff]
        %v1447 = vld [vmem:[%s344 + $0xa0] sm:$0xff]
        %v1448 = vld [vmem:[%s344 + $0xa8] sm:$0xff]
        %v1449 = vld [vmem:[%s344 + $0xb0] sm:$0xff]
        %v1450 = vld [vmem:[%s344 + $0xb8] sm:$0xff]
        %v1451 = vld [vmem:[%s344 + $0xc0] sm:$0xff]
        %v1452 = vld [vmem:[%s344 + $0xc8] sm:$0xff]
        %v1453 = vld [vmem:[%s344 + $0xd0] sm:$0xff]
        %v1454 = vld [vmem:[%s344 + $0xd8] sm:$0xff]
        %v1455 = vld [vmem:[%s344 + $0xe0] sm:$0xff]
        %v1456 = vld [vmem:[%s344 + $0xe8] sm:$0xff]
        %v1457 = vld [vmem:[%s344 + $0xf0] sm:$0xff]
        %v1458 = vld [vmem:[%s344 + $0xf8] sm:$0xff]
        %v1459 = vperm.slane %v1417, 1
        %v1460 = vperm.slane %v1418, 1
        %v1493 = vunpack.c.l.b16 %v1427
        %v1494 = vunpack.c.h.b16 %v1427
        %v1495 = vunpack.c.l.b16 %v1428
        %v1496 = vunpack.c.h.b16 %v1428
        %v1497 = vunpack.c.l.b16 %v1429
        %v1498 = vunpack.c.h.b16 %v1429
        %v1499 = vunpack.c.l.b16 %v1430
        %v1500 = vunpack.c.h.b16 %v1430
        %v1501 = vunpack.c.l.b16 %v1431
        %v1502 = vunpack.c.h.b16 %v1431
        %v1503 = vunpack.c.l.b16 %v1432
        %v1504 = vunpack.c.h.b16 %v1432
        %v1505 = vunpack.c.l.b16 %v1433
        %v1506 = vunpack.c.h.b16 %v1433
        %v1507 = vunpack.c.l.b16 %v1434
        %v1508 = vunpack.c.h.b16 %v1434
        %v1509 = vunpack.c.l.b16 %v1435
        %v1510 = vunpack.c.h.b16 %v1435
        %v1511 = vunpack.c.l.b16 %v1436
        %v1512 = vunpack.c.h.b16 %v1436
        %v1513 = vunpack.c.l.b16 %v1437
        %v1514 = vunpack.c.h.b16 %v1437
        %v1515 = vunpack.c.l.b16 %v1438
        %v1516 = vunpack.c.h.b16 %v1438
        %v1517 = vunpack.c.l.b16 %v1439
        %v1518 = vunpack.c.h.b16 %v1439
        %v1519 = vunpack.c.l.b16 %v1440
        %v1520 = vunpack.c.h.b16 %v1440
        %v1521 = vunpack.c.l.b16 %v1441
        %v1522 = vunpack.c.h.b16 %v1441
        %v1523 = vunpack.c.l.b16 %v1442
        %v1524 = vunpack.c.h.b16 %v1442
        %v1525 = vunpack.c.l.b16 %v1443
        %v1526 = vunpack.c.h.b16 %v1443
        %v1527 = vunpack.c.l.b16 %v1444
        %v1528 = vunpack.c.h.b16 %v1444
        %v1529 = vunpack.c.l.b16 %v1445
        %v1530 = vunpack.c.h.b16 %v1445
        %v1531 = vunpack.c.l.b16 %v1446
        %v1532 = vunpack.c.h.b16 %v1446
        %v1533 = vunpack.c.l.b16 %v1447
        %v1534 = vunpack.c.h.b16 %v1447
        %v1535 = vunpack.c.l.b16 %v1448
        %v1536 = vunpack.c.h.b16 %v1448
        %v1537 = vunpack.c.l.b16 %v1449
        %v1538 = vunpack.c.h.b16 %v1449
        %v1539 = vunpack.c.l.b16 %v1450
        %v1540 = vunpack.c.h.b16 %v1450
        %v1541 = vunpack.c.l.b16 %v1451
        %v1542 = vunpack.c.h.b16 %v1451
        %v1543 = vunpack.c.l.b16 %v1452
        %v1544 = vunpack.c.h.b16 %v1452
        %v1545 = vunpack.c.l.b16 %v1453
        %v1546 = vunpack.c.h.b16 %v1453
        %v1547 = vunpack.c.l.b16 %v1454
        %v1548 = vunpack.c.h.b16 %v1454
        %v1549 = vunpack.c.l.b16 %v1455
        %v1550 = vunpack.c.h.b16 %v1455
        %v1551 = vunpack.c.l.b16 %v1456
        %v1552 = vunpack.c.h.b16 %v1456
        %v1553 = vunpack.c.l.b16 %v1457
        %v1554 = vunpack.c.h.b16 %v1457
        %v1555 = vunpack.c.l.b16 %v1458
        %v1556 = vunpack.c.h.b16 %v1458
        %v1557 = vpack.c.b16 %v1495, %v1493
        %v1558 = vpack.c.b16 %v1496, %v1494
        %v1559 = vpack.c.b16 %v1499, %v1497
        %v1560 = vpack.c.b16 %v1500, %v1498
        %v1561 = vpack.c.b16 %v1503, %v1501
        %v1562 = vpack.c.b16 %v1504, %v1502
        %v1563 = vpack.c.b16 %v1507, %v1505
        %v1564 = vpack.c.b16 %v1508, %v1506
        %v1565 = vpack.c.b16 %v1511, %v1509
        %v1566 = vpack.c.b16 %v1512, %v1510
        %v1567 = vpack.c.b16 %v1515, %v1513
        %v1568 = vpack.c.b16 %v1516, %v1514
        %v1569 = vpack.c.b16 %v1519, %v1517
        %v1570 = vpack.c.b16 %v1520, %v1518
        %v1571 = vpack.c.b16 %v1523, %v1521
        %v1572 = vpack.c.b16 %v1524, %v1522
        %v1573 = vpack.c.b16 %v1527, %v1525
        %v1574 = vpack.c.b16 %v1528, %v1526
        %v1575 = vpack.c.b16 %v1531, %v1529
        %v1576 = vpack.c.b16 %v1532, %v1530
        %v1577 = vpack.c.b16 %v1535, %v1533
        %v1578 = vpack.c.b16 %v1536, %v1534
        %v1579 = vpack.c.b16 %v1539, %v1537
        %v1580 = vpack.c.b16 %v1540, %v1538
        %v1581 = vpack.c.b16 %v1543, %v1541
        %v1582 = vpack.c.b16 %v1544, %v1542
        %v1583 = vpack.c.b16 %v1547, %v1545
        %v1584 = vpack.c.b16 %v1548, %v1546
        %v1585 = vpack.c.b16 %v1551, %v1549
        %v1586 = vpack.c.b16 %v1552, %v1550
        %v1587 = vpack.c.b16 %v1555, %v1553
        %v1588 = vpack.c.b16 %v1556, %v1554
        %1621 = vmatpush.bf16.msra.mxu0 %v1571
        %1622 = vmatpush.bf16.msra.mxu0 %v1569
        %1623 = vmatpush.bf16.msra.mxu0 %v1567
        %1624 = vmatpush.bf16.msra.mxu0 %v1565
        %1625 = vmatpush.bf16.msra.mxu0 %v1563
        %1626 = vmatpush.bf16.msra.mxu0 %v1561
        %1627 = vmatpush.bf16.msra.mxu0 %v1559
        %1628 = vmatpush.bf16.msra.mxu0 %v1557
        %1629 = vmatmul.bf16.gmra.mxu0 %v1425
        %v1630 = vpop.f32.mrf.mxu0
        %v1631 = vadd.f32 %v1459, %v1630
        %v1632 = vpop.f32.mrf.mxu0
        %1633 = vdwg.mxu0
        %1634 = vmatpush.bf16.msra.mxu0 %v1587
        %1635 = vmatpush.bf16.msra.mxu0 %v1585
        %1636 = vmatpush.bf16.msra.mxu0 %v1583
        %1637 = vmatpush.bf16.msra.mxu0 %v1581
        %1638 = vmatpush.bf16.msra.mxu0 %v1579
        %1639 = vmatpush.bf16.msra.mxu0 %v1577
        %1640 = vmatpush.bf16.msra.mxu0 %v1575
        %1641 = vmatpush.bf16.msra.mxu0 %v1573
        %1642 = vmatmul.bf16.gmra.mxu0 %v1426
        %v1643 = vpop.f32.mrf.mxu0
        %v1644 = vadd.f32 %v1631, %v1643
        %v1645 = vpop.f32.mrf.mxu0
        %1646 = vdwg.mxu0
        %1647 = vmatpush.bf16.msra.mxu0 %v1572
        %1648 = vmatpush.bf16.msra.mxu0 %v1570
        %1649 = vmatpush.bf16.msra.mxu0 %v1568
        %1650 = vmatpush.bf16.msra.mxu0 %v1566
        %1651 = vmatpush.bf16.msra.mxu0 %v1564
        %1652 = vmatpush.bf16.msra.mxu0 %v1562
        %1653 = vmatpush.bf16.msra.mxu0 %v1560
        %1654 = vmatpush.bf16.msra.mxu0 %v1558
        %1655 = vmatmul.bf16.gmra.mxu0 %v1425
        %v1656 = vpop.f32.mrf.mxu0
        %v1657 = vadd.f32 %v1460, %v1656
        %v1658 = vpop.f32.mrf.mxu0
        %1659 = vdwg.mxu0
        %1660 = vmatpush.bf16.msra.mxu0 %v1588
        %1661 = vmatpush.bf16.msra.mxu0 %v1586
        %1662 = vmatpush.bf16.msra.mxu0 %v1584
        %1663 = vmatpush.bf16.msra.mxu0 %v1582
        %1664 = vmatpush.bf16.msra.mxu0 %v1580
        %1665 = vmatpush.bf16.msra.mxu0 %v1578
        %1666 = vmatpush.bf16.msra.mxu0 %v1576
        %1667 = vmatpush.bf16.msra.mxu0 %v1574
        %1668 = vmatmul.bf16.gmra.mxu0 %v1426
        %v1669 = vpop.f32.mrf.mxu0
        %v1670 = vadd.f32 %v1657, %v1669
        %v1671 = vpop.f32.mrf.mxu0
        %1672 = vdwg.mxu0
        %v1673 = vmax.f32 %v1644, 0.0
        %v1674 = vmax.f32 %v1670, 0.0
        %v1675 = vpack.c.bf16 %v1673, %v1673
        %v1676 = vpack.c.bf16 %v1674, %v1674
        %v1677 = vld [vmem:[%s354] sm:$0xff]
        %v1678 = vld [vmem:[%s354 + $0x8] sm:$0xff]
        %v1679 = vld [vmem:[%s354 + $0x10] sm:$0xff]
        %v1680 = vld [vmem:[%s354 + $0x18] sm:$0xff]
        %v1681 = vld [vmem:[%s354 + $0x20] sm:$0xff]
        %v1682 = vld [vmem:[%s354 + $0x28] sm:$0xff]
        %v1683 = vld [vmem:[%s354 + $0x30] sm:$0xff]
        %v1684 = vld [vmem:[%s354 + $0x38] sm:$0xff]
        %v1685 = vld [vmem:[%s354 + $0x40] sm:$0xff]
        %v1686 = vld [vmem:[%s354 + $0x48] sm:$0xff]
        %v1687 = vld [vmem:[%s354 + $0x50] sm:$0xff]
        %v1688 = vld [vmem:[%s354 + $0x58] sm:$0xff]
        %v1689 = vld [vmem:[%s354 + $0x60] sm:$0xff]
        %v1690 = vld [vmem:[%s354 + $0x68] sm:$0xff]
        %v1691 = vld [vmem:[%s354 + $0x70] sm:$0xff]
        %v1692 = vld [vmem:[%s354 + $0x78] sm:$0xff]
        %v1693 = vld [vmem:[%s354 + $0x80] sm:$0xff]
        %v1694 = vld [vmem:[%s354 + $0x88] sm:$0xff]
        %v1695 = vld [vmem:[%s354 + $0x90] sm:$0xff]
        %v1696 = vld [vmem:[%s354 + $0x98] sm:$0xff]
        %v1697 = vld [vmem:[%s354 + $0xa0] sm:$0xff]
        %v1698 = vld [vmem:[%s354 + $0xa8] sm:$0xff]
        %v1699 = vld [vmem:[%s354 + $0xb0] sm:$0xff]
        %v1700 = vld [vmem:[%s354 + $0xb8] sm:$0xff]
        %v1701 = vld [vmem:[%s354 + $0xc0] sm:$0xff]
        %v1702 = vld [vmem:[%s354 + $0xc8] sm:$0xff]
        %v1703 = vld [vmem:[%s354 + $0xd0] sm:$0xff]
        %v1704 = vld [vmem:[%s354 + $0xd8] sm:$0xff]
        %v1705 = vld [vmem:[%s354 + $0xe0] sm:$0xff]
        %v1706 = vld [vmem:[%s354 + $0xe8] sm:$0xff]
        %v1707 = vld [vmem:[%s354 + $0xf0] sm:$0xff]
        %v1708 = vld [vmem:[%s354 + $0xf8] sm:$0xff]
        %v1709 = vperm.slane %v1417, 2
        %v1710 = vperm.slane %v1418, 2
        %v1743 = vunpack.c.l.b16 %v1677
        %v1744 = vunpack.c.h.b16 %v1677
        %v1745 = vunpack.c.l.b16 %v1678
        %v1746 = vunpack.c.h.b16 %v1678
        %v1747 = vunpack.c.l.b16 %v1679
        %v1748 = vunpack.c.h.b16 %v1679
        %v1749 = vunpack.c.l.b16 %v1680
        %v1750 = vunpack.c.h.b16 %v1680
        %v1751 = vunpack.c.l.b16 %v1681
        %v1752 = vunpack.c.h.b16 %v1681
        %v1753 = vunpack.c.l.b16 %v1682
        %v1754 = vunpack.c.h.b16 %v1682
        %v1755 = vunpack.c.l.b16 %v1683
        %v1756 = vunpack.c.h.b16 %v1683
        %v1757 = vunpack.c.l.b16 %v1684
        %v1758 = vunpack.c.h.b16 %v1684
        %v1759 = vunpack.c.l.b16 %v1685
        %v1760 = vunpack.c.h.b16 %v1685
        %v1761 = vunpack.c.l.b16 %v1686
        %v1762 = vunpack.c.h.b16 %v1686
        %v1763 = vunpack.c.l.b16 %v1687
        %v1764 = vunpack.c.h.b16 %v1687
        %v1765 = vunpack.c.l.b16 %v1688
        %v1766 = vunpack.c.h.b16 %v1688
        %v1767 = vunpack.c.l.b16 %v1689
        %v1768 = vunpack.c.h.b16 %v1689
        %v1769 = vunpack.c.l.b16 %v1690
        %v1770 = vunpack.c.h.b16 %v1690
        %v1771 = vunpack.c.l.b16 %v1691
        %v1772 = vunpack.c.h.b16 %v1691
        %v1773 = vunpack.c.l.b16 %v1692
        %v1774 = vunpack.c.h.b16 %v1692
        %v1775 = vunpack.c.l.b16 %v1693
        %v1776 = vunpack.c.h.b16 %v1693
        %v1777 = vunpack.c.l.b16 %v1694
        %v1778 = vunpack.c.h.b16 %v1694
        %v1779 = vunpack.c.l.b16 %v1695
        %v1780 = vunpack.c.h.b16 %v1695
        %v1781 = vunpack.c.l.b16 %v1696
        %v1782 = vunpack.c.h.b16 %v1696
        %v1783 = vunpack.c.l.b16 %v1697
        %v1784 = vunpack.c.h.b16 %v1697
        %v1785 = vunpack.c.l.b16 %v1698
        %v1786 = vunpack.c.h.b16 %v1698
        %v1787 = vunpack.c.l.b16 %v1699
        %v1788 = vunpack.c.h.b16 %v1699
        %v1789 = vunpack.c.l.b16 %v1700
        %v1790 = vunpack.c.h.b16 %v1700
        %v1791 = vunpack.c.l.b16 %v1701
        %v1792 = vunpack.c.h.b16 %v1701
        %v1793 = vunpack.c.l.b16 %v1702
        %v1794 = vunpack.c.h.b16 %v1702
        %v1795 = vunpack.c.l.b16 %v1703
        %v1796 = vunpack.c.h.b16 %v1703
        %v1797 = vunpack.c.l.b16 %v1704
        %v1798 = vunpack.c.h.b16 %v1704
        %v1799 = vunpack.c.l.b16 %v1705
        %v1800 = vunpack.c.h.b16 %v1705
        %v1801 = vunpack.c.l.b16 %v1706
        %v1802 = vunpack.c.h.b16 %v1706
        %v1803 = vunpack.c.l.b16 %v1707
        %v1804 = vunpack.c.h.b16 %v1707
        %v1805 = vunpack.c.l.b16 %v1708
        %v1806 = vunpack.c.h.b16 %v1708
        %v1807 = vpack.c.b16 %v1745, %v1743
        %v1808 = vpack.c.b16 %v1746, %v1744
        %v1809 = vpack.c.b16 %v1749, %v1747
        %v1810 = vpack.c.b16 %v1750, %v1748
        %v1811 = vpack.c.b16 %v1753, %v1751
        %v1812 = vpack.c.b16 %v1754, %v1752
        %v1813 = vpack.c.b16 %v1757, %v1755
        %v1814 = vpack.c.b16 %v1758, %v1756
        %v1815 = vpack.c.b16 %v1761, %v1759
        %v1816 = vpack.c.b16 %v1762, %v1760
        %v1817 = vpack.c.b16 %v1765, %v1763
        %v1818 = vpack.c.b16 %v1766, %v1764
        %v1819 = vpack.c.b16 %v1769, %v1767
        %v1820 = vpack.c.b16 %v1770, %v1768
        %v1821 = vpack.c.b16 %v1773, %v1771
        %v1822 = vpack.c.b16 %v1774, %v1772
        %v1823 = vpack.c.b16 %v1777, %v1775
        %v1824 = vpack.c.b16 %v1778, %v1776
        %v1825 = vpack.c.b16 %v1781, %v1779
        %v1826 = vpack.c.b16 %v1782, %v1780
        %v1827 = vpack.c.b16 %v1785, %v1783
        %v1828 = vpack.c.b16 %v1786, %v1784
        %v1829 = vpack.c.b16 %v1789, %v1787
        %v1830 = vpack.c.b16 %v1790, %v1788
        %v1831 = vpack.c.b16 %v1793, %v1791
        %v1832 = vpack.c.b16 %v1794, %v1792
        %v1833 = vpack.c.b16 %v1797, %v1795
        %v1834 = vpack.c.b16 %v1798, %v1796
        %v1835 = vpack.c.b16 %v1801, %v1799
        %v1836 = vpack.c.b16 %v1802, %v1800
        %v1837 = vpack.c.b16 %v1805, %v1803
        %v1838 = vpack.c.b16 %v1806, %v1804
        %1871 = vmatpush.bf16.msra.mxu0 %v1821
        %1872 = vmatpush.bf16.msra.mxu0 %v1819
        %1873 = vmatpush.bf16.msra.mxu0 %v1817
        %1874 = vmatpush.bf16.msra.mxu0 %v1815
        %1875 = vmatpush.bf16.msra.mxu0 %v1813
        %1876 = vmatpush.bf16.msra.mxu0 %v1811
        %1877 = vmatpush.bf16.msra.mxu0 %v1809
        %1878 = vmatpush.bf16.msra.mxu0 %v1807
        %1879 = vmatmul.bf16.gmra.mxu0 %v1675
        %v1880 = vpop.f32.mrf.mxu0
        %v1881 = vadd.f32 %v1709, %v1880
        %v1882 = vpop.f32.mrf.mxu0
        %1883 = vdwg.mxu0
        %1884 = vmatpush.bf16.msra.mxu0 %v1837
        %1885 = vmatpush.bf16.msra.mxu0 %v1835
        %1886 = vmatpush.bf16.msra.mxu0 %v1833
        %1887 = vmatpush.bf16.msra.mxu0 %v1831
        %1888 = vmatpush.bf16.msra.mxu0 %v1829
        %1889 = vmatpush.bf16.msra.mxu0 %v1827
        %1890 = vmatpush.bf16.msra.mxu0 %v1825
        %1891 = vmatpush.bf16.msra.mxu0 %v1823
        %1892 = vmatmul.bf16.gmra.mxu0 %v1676
        %v1893 = vpop.f32.mrf.mxu0
        %v1894 = vadd.f32 %v1881, %v1893
        %v1895 = vpop.f32.mrf.mxu0
        %1896 = vdwg.mxu0
        %1897 = vmatpush.bf16.msra.mxu0 %v1822
        %1898 = vmatpush.bf16.msra.mxu0 %v1820
        %1899 = vmatpush.bf16.msra.mxu0 %v1818
        %1900 = vmatpush.bf16.msra.mxu0 %v1816
        %1901 = vmatpush.bf16.msra.mxu0 %v1814
        %1902 = vmatpush.bf16.msra.mxu0 %v1812
        %1903 = vmatpush.bf16.msra.mxu0 %v1810
        %1904 = vmatpush.bf16.msra.mxu0 %v1808
        %1905 = vmatmul.bf16.gmra.mxu0 %v1675
        %v1906 = vpop.f32.mrf.mxu0
        %v1907 = vadd.f32 %v1710, %v1906
        %v1908 = vpop.f32.mrf.mxu0
        %1909 = vdwg.mxu0
        %1910 = vmatpush.bf16.msra.mxu0 %v1838
        %1911 = vmatpush.bf16.msra.mxu0 %v1836
        %1912 = vmatpush.bf16.msra.mxu0 %v1834
        %1913 = vmatpush.bf16.msra.mxu0 %v1832
        %1914 = vmatpush.bf16.msra.mxu0 %v1830
        %1915 = vmatpush.bf16.msra.mxu0 %v1828
        %1916 = vmatpush.bf16.msra.mxu0 %v1826
        %1917 = vmatpush.bf16.msra.mxu0 %v1824
        %1918 = vmatmul.bf16.gmra.mxu0 %v1676
        %v1919 = vpop.f32.mrf.mxu0
        %v1920 = vadd.f32 %v1907, %v1919
        %v1921 = vpop.f32.mrf.mxu0
        %1922 = vdwg.mxu0
        %v1923 = vmax.f32 %v1894, 0.0
        %v1924 = vmax.f32 %v1920, 0.0
        %v1925 = vpack.c.bf16 %v1923, %v1923
        %v1926 = vpack.c.bf16 %v1924, %v1924
        %v1927 = vld [vmem:[%s364] sm:$0xff]
        %v1928 = vld [vmem:[%s364 + $0x8] sm:$0xff]
        %v1929 = vld [vmem:[%s364 + $0x10] sm:$0xff]
        %v1930 = vld [vmem:[%s364 + $0x18] sm:$0xff]
        %v1931 = vld [vmem:[%s364 + $0x20] sm:$0xff]
        %v1932 = vld [vmem:[%s364 + $0x28] sm:$0xff]
        %v1933 = vld [vmem:[%s364 + $0x30] sm:$0xff]
        %v1934 = vld [vmem:[%s364 + $0x38] sm:$0xff]
        %v1935 = vld [vmem:[%s364 + $0x40] sm:$0xff]
        %v1936 = vld [vmem:[%s364 + $0x48] sm:$0xff]
        %v1937 = vld [vmem:[%s364 + $0x50] sm:$0xff]
        %v1938 = vld [vmem:[%s364 + $0x58] sm:$0xff]
        %v1939 = vld [vmem:[%s364 + $0x60] sm:$0xff]
        %v1940 = vld [vmem:[%s364 + $0x68] sm:$0xff]
        %v1941 = vld [vmem:[%s364 + $0x70] sm:$0xff]
        %v1942 = vld [vmem:[%s364 + $0x78] sm:$0xff]
        %v1943 = vld [vmem:[%s364 + $0x80] sm:$0xff]
        %v1944 = vld [vmem:[%s364 + $0x88] sm:$0xff]
        %v1945 = vld [vmem:[%s364 + $0x90] sm:$0xff]
        %v1946 = vld [vmem:[%s364 + $0x98] sm:$0xff]
        %v1947 = vld [vmem:[%s364 + $0xa0] sm:$0xff]
        %v1948 = vld [vmem:[%s364 + $0xa8] sm:$0xff]
        %v1949 = vld [vmem:[%s364 + $0xb0] sm:$0xff]
        %v1950 = vld [vmem:[%s364 + $0xb8] sm:$0xff]
        %v1951 = vld [vmem:[%s364 + $0xc0] sm:$0xff]
        %v1952 = vld [vmem:[%s364 + $0xc8] sm:$0xff]
        %v1953 = vld [vmem:[%s364 + $0xd0] sm:$0xff]
        %v1954 = vld [vmem:[%s364 + $0xd8] sm:$0xff]
        %v1955 = vld [vmem:[%s364 + $0xe0] sm:$0xff]
        %v1956 = vld [vmem:[%s364 + $0xe8] sm:$0xff]
        %v1957 = vld [vmem:[%s364 + $0xf0] sm:$0xff]
        %v1958 = vld [vmem:[%s364 + $0xf8] sm:$0xff]
        %v1959 = vperm.slane %v1417, 3
        %v1960 = vperm.slane %v1418, 3
        %v1993 = vunpack.c.l.b16 %v1927
        %v1994 = vunpack.c.h.b16 %v1927
        %v1995 = vunpack.c.l.b16 %v1928
        %v1996 = vunpack.c.h.b16 %v1928
        %v1997 = vunpack.c.l.b16 %v1929
        %v1998 = vunpack.c.h.b16 %v1929
        %v1999 = vunpack.c.l.b16 %v1930
        %v2000 = vunpack.c.h.b16 %v1930
        %v2001 = vunpack.c.l.b16 %v1931
        %v2002 = vunpack.c.h.b16 %v1931
        %v2003 = vunpack.c.l.b16 %v1932
        %v2004 = vunpack.c.h.b16 %v1932
        %v2005 = vunpack.c.l.b16 %v1933
        %v2006 = vunpack.c.h.b16 %v1933
        %v2007 = vunpack.c.l.b16 %v1934
        %v2008 = vunpack.c.h.b16 %v1934
        %v2009 = vunpack.c.l.b16 %v1935
        %v2010 = vunpack.c.h.b16 %v1935
        %v2011 = vunpack.c.l.b16 %v1936
        %v2012 = vunpack.c.h.b16 %v1936
        %v2013 = vunpack.c.l.b16 %v1937
        %v2014 = vunpack.c.h.b16 %v1937
        %v2015 = vunpack.c.l.b16 %v1938
        %v2016 = vunpack.c.h.b16 %v1938
        %v2017 = vunpack.c.l.b16 %v1939
        %v2018 = vunpack.c.h.b16 %v1939
        %v2019 = vunpack.c.l.b16 %v1940
        %v2020 = vunpack.c.h.b16 %v1940
        %v2021 = vunpack.c.l.b16 %v1941
        %v2022 = vunpack.c.h.b16 %v1941
        %v2023 = vunpack.c.l.b16 %v1942
        %v2024 = vunpack.c.h.b16 %v1942
        %v2025 = vunpack.c.l.b16 %v1943
        %v2026 = vunpack.c.h.b16 %v1943
        %v2027 = vunpack.c.l.b16 %v1944
        %v2028 = vunpack.c.h.b16 %v1944
        %v2029 = vunpack.c.l.b16 %v1945
        %v2030 = vunpack.c.h.b16 %v1945
        %v2031 = vunpack.c.l.b16 %v1946
        %v2032 = vunpack.c.h.b16 %v1946
        %v2033 = vunpack.c.l.b16 %v1947
        %v2034 = vunpack.c.h.b16 %v1947
        %v2035 = vunpack.c.l.b16 %v1948
        %v2036 = vunpack.c.h.b16 %v1948
        %v2037 = vunpack.c.l.b16 %v1949
        %v2038 = vunpack.c.h.b16 %v1949
        %v2039 = vunpack.c.l.b16 %v1950
        %v2040 = vunpack.c.h.b16 %v1950
        %v2041 = vunpack.c.l.b16 %v1951
        %v2042 = vunpack.c.h.b16 %v1951
        %v2043 = vunpack.c.l.b16 %v1952
        %v2044 = vunpack.c.h.b16 %v1952
        %v2045 = vunpack.c.l.b16 %v1953
        %v2046 = vunpack.c.h.b16 %v1953
        %v2047 = vunpack.c.l.b16 %v1954
        %v2048 = vunpack.c.h.b16 %v1954
        %v2049 = vunpack.c.l.b16 %v1955
        %v2050 = vunpack.c.h.b16 %v1955
        %v2051 = vunpack.c.l.b16 %v1956
        %v2052 = vunpack.c.h.b16 %v1956
        %v2053 = vunpack.c.l.b16 %v1957
        %v2054 = vunpack.c.h.b16 %v1957
        %v2055 = vunpack.c.l.b16 %v1958
        %v2056 = vunpack.c.h.b16 %v1958
        %v2057 = vpack.c.b16 %v1995, %v1993
        %v2058 = vpack.c.b16 %v1996, %v1994
        %v2059 = vpack.c.b16 %v1999, %v1997
        %v2060 = vpack.c.b16 %v2000, %v1998
        %v2061 = vpack.c.b16 %v2003, %v2001
        %v2062 = vpack.c.b16 %v2004, %v2002
        %v2063 = vpack.c.b16 %v2007, %v2005
        %v2064 = vpack.c.b16 %v2008, %v2006
        %v2065 = vpack.c.b16 %v2011, %v2009
        %v2066 = vpack.c.b16 %v2012, %v2010
        %v2067 = vpack.c.b16 %v2015, %v2013
        %v2068 = vpack.c.b16 %v2016, %v2014
        %v2069 = vpack.c.b16 %v2019, %v2017
        %v2070 = vpack.c.b16 %v2020, %v2018
        %v2071 = vpack.c.b16 %v2023, %v2021
        %v2072 = vpack.c.b16 %v2024, %v2022
        %v2073 = vpack.c.b16 %v2027, %v2025
        %v2074 = vpack.c.b16 %v2028, %v2026
        %v2075 = vpack.c.b16 %v2031, %v2029
        %v2076 = vpack.c.b16 %v2032, %v2030
        %v2077 = vpack.c.b16 %v2035, %v2033
        %v2078 = vpack.c.b16 %v2036, %v2034
        %v2079 = vpack.c.b16 %v2039, %v2037
        %v2080 = vpack.c.b16 %v2040, %v2038
        %v2081 = vpack.c.b16 %v2043, %v2041
        %v2082 = vpack.c.b16 %v2044, %v2042
        %v2083 = vpack.c.b16 %v2047, %v2045
        %v2084 = vpack.c.b16 %v2048, %v2046
        %v2085 = vpack.c.b16 %v2051, %v2049
        %v2086 = vpack.c.b16 %v2052, %v2050
        %v2087 = vpack.c.b16 %v2055, %v2053
        %v2088 = vpack.c.b16 %v2056, %v2054
        %2121 = vmatpush.bf16.msra.mxu0 %v2071
        %2122 = vmatpush.bf16.msra.mxu0 %v2069
        %2123 = vmatpush.bf16.msra.mxu0 %v2067
        %2124 = vmatpush.bf16.msra.mxu0 %v2065
        %2125 = vmatpush.bf16.msra.mxu0 %v2063
        %2126 = vmatpush.bf16.msra.mxu0 %v2061
        %2127 = vmatpush.bf16.msra.mxu0 %v2059
        %2128 = vmatpush.bf16.msra.mxu0 %v2057
        %2129 = vmatmul.bf16.gmra.mxu0 %v1925
        %v2130 = vpop.f32.mrf.mxu0
        %v2131 = vadd.f32 %v1959, %v2130
        %v2132 = vpop.f32.mrf.mxu0
        %2133 = vdwg.mxu0
        %2134 = vmatpush.bf16.msra.mxu0 %v2087
        %2135 = vmatpush.bf16.msra.mxu0 %v2085
        %2136 = vmatpush.bf16.msra.mxu0 %v2083
        %2137 = vmatpush.bf16.msra.mxu0 %v2081
        %2138 = vmatpush.bf16.msra.mxu0 %v2079
        %2139 = vmatpush.bf16.msra.mxu0 %v2077
        %2140 = vmatpush.bf16.msra.mxu0 %v2075
        %2141 = vmatpush.bf16.msra.mxu0 %v2073
        %2142 = vmatmul.bf16.gmra.mxu0 %v1926
        %v2143 = vpop.f32.mrf.mxu0
        %v2144 = vadd.f32 %v2131, %v2143
        %v2145 = vpop.f32.mrf.mxu0
        %2146 = vdwg.mxu0
        %2147 = vmatpush.bf16.msra.mxu0 %v2072
        %2148 = vmatpush.bf16.msra.mxu0 %v2070
        %2149 = vmatpush.bf16.msra.mxu0 %v2068
        %2150 = vmatpush.bf16.msra.mxu0 %v2066
        %2151 = vmatpush.bf16.msra.mxu0 %v2064
        %2152 = vmatpush.bf16.msra.mxu0 %v2062
        %2153 = vmatpush.bf16.msra.mxu0 %v2060
        %2154 = vmatpush.bf16.msra.mxu0 %v2058
        %2155 = vmatmul.bf16.gmra.mxu0 %v1925
        %v2156 = vpop.f32.mrf.mxu0
        %v2157 = vadd.f32 %v1960, %v2156
        %v2158 = vpop.f32.mrf.mxu0
        %2159 = vdwg.mxu0
        %2160 = vmatpush.bf16.msra.mxu0 %v2088
        %2161 = vmatpush.bf16.msra.mxu0 %v2086
        %2162 = vmatpush.bf16.msra.mxu0 %v2084
        %2163 = vmatpush.bf16.msra.mxu0 %v2082
        %2164 = vmatpush.bf16.msra.mxu0 %v2080
        %2165 = vmatpush.bf16.msra.mxu0 %v2078
        %2166 = vmatpush.bf16.msra.mxu0 %v2076
        %2167 = vmatpush.bf16.msra.mxu0 %v2074
        %2168 = vmatmul.bf16.gmra.mxu0 %v1926
        %v2169 = vpop.f32.mrf.mxu0
        %v2170 = vadd.f32 %v2157, %v2169
        %v2171 = vpop.f32.mrf.mxu0
        %2172 = vdwg.mxu0
        %v2173 = vmax.f32 %v2144, 0.0
        %v2174 = vmax.f32 %v2170, 0.0
        %v2175 = vperm.slane %v1417, 4
        %v2176 = vperm.slane %v1418, 4
        %v2177 = vmul.f32 %v2173, %v2175
        %v2178 = vmul.f32 %v2174, %v2176
        %2179 = vadd.xlane.f32.xlu0 %v2177
        %v2180 = vpop.xlane.xlu0 %2179
        %v2181 = vperm.slane %v1417, 5
        %v2182 = vadd.f32 %v2180, %v2181
        %v2183 = vmax.f32 %v1416, %v2182
        %2184 = vadd.xlane.f32.xlu0 %v2178
        %v2185 = vpop.xlane.xlu0 %2184
        %v2186 = vperm.slane %v1418, 5
        %v2187 = vadd.f32 %v2185, %v2186
        %v2188 = vmax.f32 %v2183, %v2187
        %s2189 = scalar_lea.vmem %s413, 16
        %v2190 = vld [vmem:[%s2189] sm:$0x3f]
        %v2191 = vld [vmem:[%s2189 + $0x8] sm:$0x3f]
        %v2192 = vperm.slane %v2190, 0
        %v2193 = vperm.slane %v2191, 0
        %v2194 = vadd.f32 %v1361, %v2192
        %v2195 = vadd.f32 %v1413, %v2193
        %v2196 = vmax.f32 %v2194, 0.0
        %v2197 = vmax.f32 %v2195, 0.0
        %v2198 = vpack.c.bf16 %v2196, %v2196
        %v2199 = vpack.c.bf16 %v2197, %v2197
        %s2200 = scalar_lea.vmem %s344, 256 [#allocation7]
        %v2201 = vld [vmem:[%s2200] sm:$0xff]
        %v2202 = vld [vmem:[%s2200 + $0x8] sm:$0xff]
        %v2203 = vld [vmem:[%s2200 + $0x10] sm:$0xff]
        %v2204 = vld [vmem:[%s2200 + $0x18] sm:$0xff]
        %v2205 = vld [vmem:[%s2200 + $0x20] sm:$0xff]
        %v2206 = vld [vmem:[%s2200 + $0x28] sm:$0xff]
        %v2207 = vld [vmem:[%s2200 + $0x30] sm:$0xff]
        %v2208 = vld [vmem:[%s2200 + $0x38] sm:$0xff]
        %v2209 = vld [vmem:[%s2200 + $0x40] sm:$0xff]
        %v2210 = vld [vmem:[%s2200 + $0x48] sm:$0xff]
        %v2211 = vld [vmem:[%s2200 + $0x50] sm:$0xff]
        %v2212 = vld [vmem:[%s2200 + $0x58] sm:$0xff]
        %v2213 = vld [vmem:[%s2200 + $0x60] sm:$0xff]
        %v2214 = vld [vmem:[%s2200 + $0x68] sm:$0xff]
        %v2215 = vld [vmem:[%s2200 + $0x70] sm:$0xff]
        %v2216 = vld [vmem:[%s2200 + $0x78] sm:$0xff]
        %v2217 = vld [vmem:[%s2200 + $0x80] sm:$0xff]
        %v2218 = vld [vmem:[%s2200 + $0x88] sm:$0xff]
        %v2219 = vld [vmem:[%s2200 + $0x90] sm:$0xff]
        %v2220 = vld [vmem:[%s2200 + $0x98] sm:$0xff]
        %v2221 = vld [vmem:[%s2200 + $0xa0] sm:$0xff]
        %v2222 = vld [vmem:[%s2200 + $0xa8] sm:$0xff]
        %v2223 = vld [vmem:[%s2200 + $0xb0] sm:$0xff]
        %v2224 = vld [vmem:[%s2200 + $0xb8] sm:$0xff]
        %v2225 = vld [vmem:[%s2200 + $0xc0] sm:$0xff]
        %v2226 = vld [vmem:[%s2200 + $0xc8] sm:$0xff]
        %v2227 = vld [vmem:[%s2200 + $0xd0] sm:$0xff]
        %v2228 = vld [vmem:[%s2200 + $0xd8] sm:$0xff]
        %v2229 = vld [vmem:[%s2200 + $0xe0] sm:$0xff]
        %v2230 = vld [vmem:[%s2200 + $0xe8] sm:$0xff]
        %v2231 = vld [vmem:[%s2200 + $0xf0] sm:$0xff]
        %v2232 = vld [vmem:[%s2200 + $0xf8] sm:$0xff]
        %v2233 = vperm.slane %v2190, 1
        %v2234 = vperm.slane %v2191, 1
        %v2267 = vunpack.c.l.b16 %v2201
        %v2268 = vunpack.c.h.b16 %v2201
        %v2269 = vunpack.c.l.b16 %v2202
        %v2270 = vunpack.c.h.b16 %v2202
        %v2271 = vunpack.c.l.b16 %v2203
        %v2272 = vunpack.c.h.b16 %v2203
        %v2273 = vunpack.c.l.b16 %v2204
        %v2274 = vunpack.c.h.b16 %v2204
        %v2275 = vunpack.c.l.b16 %v2205
        %v2276 = vunpack.c.h.b16 %v2205
        %v2277 = vunpack.c.l.b16 %v2206
        %v2278 = vunpack.c.h.b16 %v2206
        %v2279 = vunpack.c.l.b16 %v2207
        %v2280 = vunpack.c.h.b16 %v2207
        %v2281 = vunpack.c.l.b16 %v2208
        %v2282 = vunpack.c.h.b16 %v2208
        %v2283 = vunpack.c.l.b16 %v2209
        %v2284 = vunpack.c.h.b16 %v2209
        %v2285 = vunpack.c.l.b16 %v2210
        %v2286 = vunpack.c.h.b16 %v2210
        %v2287 = vunpack.c.l.b16 %v2211
        %v2288 = vunpack.c.h.b16 %v2211
        %v2289 = vunpack.c.l.b16 %v2212
        %v2290 = vunpack.c.h.b16 %v2212
        %v2291 = vunpack.c.l.b16 %v2213
        %v2292 = vunpack.c.h.b16 %v2213
        %v2293 = vunpack.c.l.b16 %v2214
        %v2294 = vunpack.c.h.b16 %v2214
        %v2295 = vunpack.c.l.b16 %v2215
        %v2296 = vunpack.c.h.b16 %v2215
        %v2297 = vunpack.c.l.b16 %v2216
        %v2298 = vunpack.c.h.b16 %v2216
        %v2299 = vunpack.c.l.b16 %v2217
        %v2300 = vunpack.c.h.b16 %v2217
        %v2301 = vunpack.c.l.b16 %v2218
        %v2302 = vunpack.c.h.b16 %v2218
        %v2303 = vunpack.c.l.b16 %v2219
        %v2304 = vunpack.c.h.b16 %v2219
        %v2305 = vunpack.c.l.b16 %v2220
        %v2306 = vunpack.c.h.b16 %v2220
        %v2307 = vunpack.c.l.b16 %v2221
        %v2308 = vunpack.c.h.b16 %v2221
        %v2309 = vunpack.c.l.b16 %v2222
        %v2310 = vunpack.c.h.b16 %v2222
        %v2311 = vunpack.c.l.b16 %v2223
        %v2312 = vunpack.c.h.b16 %v2223
        %v2313 = vunpack.c.l.b16 %v2224
        %v2314 = vunpack.c.h.b16 %v2224
        %v2315 = vunpack.c.l.b16 %v2225
        %v2316 = vunpack.c.h.b16 %v2225
        %v2317 = vunpack.c.l.b16 %v2226
        %v2318 = vunpack.c.h.b16 %v2226
        %v2319 = vunpack.c.l.b16 %v2227
        %v2320 = vunpack.c.h.b16 %v2227
        %v2321 = vunpack.c.l.b16 %v2228
        %v2322 = vunpack.c.h.b16 %v2228
        %v2323 = vunpack.c.l.b16 %v2229
        %v2324 = vunpack.c.h.b16 %v2229
        %v2325 = vunpack.c.l.b16 %v2230
        %v2326 = vunpack.c.h.b16 %v2230
        %v2327 = vunpack.c.l.b16 %v2231
        %v2328 = vunpack.c.h.b16 %v2231
        %v2329 = vunpack.c.l.b16 %v2232
        %v2330 = vunpack.c.h.b16 %v2232
        %v2331 = vpack.c.b16 %v2269, %v2267
        %v2332 = vpack.c.b16 %v2270, %v2268
        %v2333 = vpack.c.b16 %v2273, %v2271
        %v2334 = vpack.c.b16 %v2274, %v2272
        %v2335 = vpack.c.b16 %v2277, %v2275
        %v2336 = vpack.c.b16 %v2278, %v2276
        %v2337 = vpack.c.b16 %v2281, %v2279
        %v2338 = vpack.c.b16 %v2282, %v2280
        %v2339 = vpack.c.b16 %v2285, %v2283
        %v2340 = vpack.c.b16 %v2286, %v2284
        %v2341 = vpack.c.b16 %v2289, %v2287
        %v2342 = vpack.c.b16 %v2290, %v2288
        %v2343 = vpack.c.b16 %v2293, %v2291
        %v2344 = vpack.c.b16 %v2294, %v2292
        %v2345 = vpack.c.b16 %v2297, %v2295
        %v2346 = vpack.c.b16 %v2298, %v2296
        %v2347 = vpack.c.b16 %v2301, %v2299
        %v2348 = vpack.c.b16 %v2302, %v2300
        %v2349 = vpack.c.b16 %v2305, %v2303
        %v2350 = vpack.c.b16 %v2306, %v2304
        %v2351 = vpack.c.b16 %v2309, %v2307
        %v2352 = vpack.c.b16 %v2310, %v2308
        %v2353 = vpack.c.b16 %v2313, %v2311
        %v2354 = vpack.c.b16 %v2314, %v2312
        %v2355 = vpack.c.b16 %v2317, %v2315
        %v2356 = vpack.c.b16 %v2318, %v2316
        %v2357 = vpack.c.b16 %v2321, %v2319
        %v2358 = vpack.c.b16 %v2322, %v2320
        %v2359 = vpack.c.b16 %v2325, %v2323
        %v2360 = vpack.c.b16 %v2326, %v2324
        %v2361 = vpack.c.b16 %v2329, %v2327
        %v2362 = vpack.c.b16 %v2330, %v2328
        %2395 = vmatpush.bf16.msra.mxu0 %v2345
        %2396 = vmatpush.bf16.msra.mxu0 %v2343
        %2397 = vmatpush.bf16.msra.mxu0 %v2341
        %2398 = vmatpush.bf16.msra.mxu0 %v2339
        %2399 = vmatpush.bf16.msra.mxu0 %v2337
        %2400 = vmatpush.bf16.msra.mxu0 %v2335
        %2401 = vmatpush.bf16.msra.mxu0 %v2333
        %2402 = vmatpush.bf16.msra.mxu0 %v2331
        %2403 = vmatmul.bf16.gmra.mxu0 %v2198
        %v2404 = vpop.f32.mrf.mxu0
        %v2405 = vadd.f32 %v2233, %v2404
        %v2406 = vpop.f32.mrf.mxu0
        %2407 = vdwg.mxu0
        %2408 = vmatpush.bf16.msra.mxu0 %v2361
        %2409 = vmatpush.bf16.msra.mxu0 %v2359
        %2410 = vmatpush.bf16.msra.mxu0 %v2357
        %2411 = vmatpush.bf16.msra.mxu0 %v2355
        %2412 = vmatpush.bf16.msra.mxu0 %v2353
        %2413 = vmatpush.bf16.msra.mxu0 %v2351
        %2414 = vmatpush.bf16.msra.mxu0 %v2349
        %2415 = vmatpush.bf16.msra.mxu0 %v2347
        %2416 = vmatmul.bf16.gmra.mxu0 %v2199
        %v2417 = vpop.f32.mrf.mxu0
        %v2418 = vadd.f32 %v2405, %v2417
        %v2419 = vpop.f32.mrf.mxu0
        %2420 = vdwg.mxu0
        %2421 = vmatpush.bf16.msra.mxu0 %v2346
        %2422 = vmatpush.bf16.msra.mxu0 %v2344
        %2423 = vmatpush.bf16.msra.mxu0 %v2342
        %2424 = vmatpush.bf16.msra.mxu0 %v2340
        %2425 = vmatpush.bf16.msra.mxu0 %v2338
        %2426 = vmatpush.bf16.msra.mxu0 %v2336
        %2427 = vmatpush.bf16.msra.mxu0 %v2334
        %2428 = vmatpush.bf16.msra.mxu0 %v2332
        %2429 = vmatmul.bf16.gmra.mxu0 %v2198
        %v2430 = vpop.f32.mrf.mxu0
        %v2431 = vadd.f32 %v2234, %v2430
        %v2432 = vpop.f32.mrf.mxu0
        %2433 = vdwg.mxu0
        %2434 = vmatpush.bf16.msra.mxu0 %v2362
        %2435 = vmatpush.bf16.msra.mxu0 %v2360
        %2436 = vmatpush.bf16.msra.mxu0 %v2358
        %2437 = vmatpush.bf16.msra.mxu0 %v2356
        %2438 = vmatpush.bf16.msra.mxu0 %v2354
        %2439 = vmatpush.bf16.msra.mxu0 %v2352
        %2440 = vmatpush.bf16.msra.mxu0 %v2350
        %2441 = vmatpush.bf16.msra.mxu0 %v2348
        %2442 = vmatmul.bf16.gmra.mxu0 %v2199
        %v2443 = vpop.f32.mrf.mxu0
        %v2444 = vadd.f32 %v2431, %v2443
        %v2445 = vpop.f32.mrf.mxu0
        %2446 = vdwg.mxu0
        %v2447 = vmax.f32 %v2418, 0.0
        %v2448 = vmax.f32 %v2444, 0.0
        %v2449 = vpack.c.bf16 %v2447, %v2447
        %v2450 = vpack.c.bf16 %v2448, %v2448
        %s2451 = scalar_lea.vmem %s354, 256 [#allocation8]
        %v2452 = vld [vmem:[%s2451] sm:$0xff]
        %v2453 = vld [vmem:[%s2451 + $0x8] sm:$0xff]
        %v2454 = vld [vmem:[%s2451 + $0x10] sm:$0xff]
        %v2455 = vld [vmem:[%s2451 + $0x18] sm:$0xff]
        %v2456 = vld [vmem:[%s2451 + $0x20] sm:$0xff]
        %v2457 = vld [vmem:[%s2451 + $0x28] sm:$0xff]
        %v2458 = vld [vmem:[%s2451 + $0x30] sm:$0xff]
        %v2459 = vld [vmem:[%s2451 + $0x38] sm:$0xff]
        %v2460 = vld [vmem:[%s2451 + $0x40] sm:$0xff]
        %v2461 = vld [vmem:[%s2451 + $0x48] sm:$0xff]
        %v2462 = vld [vmem:[%s2451 + $0x50] sm:$0xff]
        %v2463 = vld [vmem:[%s2451 + $0x58] sm:$0xff]
        %v2464 = vld [vmem:[%s2451 + $0x60] sm:$0xff]
        %v2465 = vld [vmem:[%s2451 + $0x68] sm:$0xff]
        %v2466 = vld [vmem:[%s2451 + $0x70] sm:$0xff]
        %v2467 = vld [vmem:[%s2451 + $0x78] sm:$0xff]
        %v2468 = vld [vmem:[%s2451 + $0x80] sm:$0xff]
        %v2469 = vld [vmem:[%s2451 + $0x88] sm:$0xff]
        %v2470 = vld [vmem:[%s2451 + $0x90] sm:$0xff]
        %v2471 = vld [vmem:[%s2451 + $0x98] sm:$0xff]
        %v2472 = vld [vmem:[%s2451 + $0xa0] sm:$0xff]
        %v2473 = vld [vmem:[%s2451 + $0xa8] sm:$0xff]
        %v2474 = vld [vmem:[%s2451 + $0xb0] sm:$0xff]
        %v2475 = vld [vmem:[%s2451 + $0xb8] sm:$0xff]
        %v2476 = vld [vmem:[%s2451 + $0xc0] sm:$0xff]
        %v2477 = vld [vmem:[%s2451 + $0xc8] sm:$0xff]
        %v2478 = vld [vmem:[%s2451 + $0xd0] sm:$0xff]
        %v2479 = vld [vmem:[%s2451 + $0xd8] sm:$0xff]
        %v2480 = vld [vmem:[%s2451 + $0xe0] sm:$0xff]
        %v2481 = vld [vmem:[%s2451 + $0xe8] sm:$0xff]
        %v2482 = vld [vmem:[%s2451 + $0xf0] sm:$0xff]
        %v2483 = vld [vmem:[%s2451 + $0xf8] sm:$0xff]
        %v2484 = vperm.slane %v2190, 2
        %v2485 = vperm.slane %v2191, 2
        %v2518 = vunpack.c.l.b16 %v2452
        %v2519 = vunpack.c.h.b16 %v2452
        %v2520 = vunpack.c.l.b16 %v2453
        %v2521 = vunpack.c.h.b16 %v2453
        %v2522 = vunpack.c.l.b16 %v2454
        %v2523 = vunpack.c.h.b16 %v2454
        %v2524 = vunpack.c.l.b16 %v2455
        %v2525 = vunpack.c.h.b16 %v2455
        %v2526 = vunpack.c.l.b16 %v2456
        %v2527 = vunpack.c.h.b16 %v2456
        %v2528 = vunpack.c.l.b16 %v2457
        %v2529 = vunpack.c.h.b16 %v2457
        %v2530 = vunpack.c.l.b16 %v2458
        %v2531 = vunpack.c.h.b16 %v2458
        %v2532 = vunpack.c.l.b16 %v2459
        %v2533 = vunpack.c.h.b16 %v2459
        %v2534 = vunpack.c.l.b16 %v2460
        %v2535 = vunpack.c.h.b16 %v2460
        %v2536 = vunpack.c.l.b16 %v2461
        %v2537 = vunpack.c.h.b16 %v2461
        %v2538 = vunpack.c.l.b16 %v2462
        %v2539 = vunpack.c.h.b16 %v2462
        %v2540 = vunpack.c.l.b16 %v2463
        %v2541 = vunpack.c.h.b16 %v2463
        %v2542 = vunpack.c.l.b16 %v2464
        %v2543 = vunpack.c.h.b16 %v2464
        %v2544 = vunpack.c.l.b16 %v2465
        %v2545 = vunpack.c.h.b16 %v2465
        %v2546 = vunpack.c.l.b16 %v2466
        %v2547 = vunpack.c.h.b16 %v2466
        %v2548 = vunpack.c.l.b16 %v2467
        %v2549 = vunpack.c.h.b16 %v2467
        %v2550 = vunpack.c.l.b16 %v2468
        %v2551 = vunpack.c.h.b16 %v2468
        %v2552 = vunpack.c.l.b16 %v2469
        %v2553 = vunpack.c.h.b16 %v2469
        %v2554 = vunpack.c.l.b16 %v2470
        %v2555 = vunpack.c.h.b16 %v2470
        %v2556 = vunpack.c.l.b16 %v2471
        %v2557 = vunpack.c.h.b16 %v2471
        %v2558 = vunpack.c.l.b16 %v2472
        %v2559 = vunpack.c.h.b16 %v2472
        %v2560 = vunpack.c.l.b16 %v2473
        %v2561 = vunpack.c.h.b16 %v2473
        %v2562 = vunpack.c.l.b16 %v2474
        %v2563 = vunpack.c.h.b16 %v2474
        %v2564 = vunpack.c.l.b16 %v2475
        %v2565 = vunpack.c.h.b16 %v2475
        %v2566 = vunpack.c.l.b16 %v2476
        %v2567 = vunpack.c.h.b16 %v2476
        %v2568 = vunpack.c.l.b16 %v2477
        %v2569 = vunpack.c.h.b16 %v2477
        %v2570 = vunpack.c.l.b16 %v2478
        %v2571 = vunpack.c.h.b16 %v2478
        %v2572 = vunpack.c.l.b16 %v2479
        %v2573 = vunpack.c.h.b16 %v2479
        %v2574 = vunpack.c.l.b16 %v2480
        %v2575 = vunpack.c.h.b16 %v2480
        %v2576 = vunpack.c.l.b16 %v2481
        %v2577 = vunpack.c.h.b16 %v2481
        %v2578 = vunpack.c.l.b16 %v2482
        %v2579 = vunpack.c.h.b16 %v2482
        %v2580 = vunpack.c.l.b16 %v2483
        %v2581 = vunpack.c.h.b16 %v2483
        %v2582 = vpack.c.b16 %v2520, %v2518
        %v2583 = vpack.c.b16 %v2521, %v2519
        %v2584 = vpack.c.b16 %v2524, %v2522
        %v2585 = vpack.c.b16 %v2525, %v2523
        %v2586 = vpack.c.b16 %v2528, %v2526
        %v2587 = vpack.c.b16 %v2529, %v2527
        %v2588 = vpack.c.b16 %v2532, %v2530
        %v2589 = vpack.c.b16 %v2533, %v2531
        %v2590 = vpack.c.b16 %v2536, %v2534
        %v2591 = vpack.c.b16 %v2537, %v2535
        %v2592 = vpack.c.b16 %v2540, %v2538
        %v2593 = vpack.c.b16 %v2541, %v2539
        %v2594 = vpack.c.b16 %v2544, %v2542
        %v2595 = vpack.c.b16 %v2545, %v2543
        %v2596 = vpack.c.b16 %v2548, %v2546
        %v2597 = vpack.c.b16 %v2549, %v2547
        %v2598 = vpack.c.b16 %v2552, %v2550
        %v2599 = vpack.c.b16 %v2553, %v2551
        %v2600 = vpack.c.b16 %v2556, %v2554
        %v2601 = vpack.c.b16 %v2557, %v2555
        %v2602 = vpack.c.b16 %v2560, %v2558
        %v2603 = vpack.c.b16 %v2561, %v2559
        %v2604 = vpack.c.b16 %v2564, %v2562
        %v2605 = vpack.c.b16 %v2565, %v2563
        %v2606 = vpack.c.b16 %v2568, %v2566
        %v2607 = vpack.c.b16 %v2569, %v2567
        %v2608 = vpack.c.b16 %v2572, %v2570
        %v2609 = vpack.c.b16 %v2573, %v2571
        %v2610 = vpack.c.b16 %v2576, %v2574
        %v2611 = vpack.c.b16 %v2577, %v2575
        %v2612 = vpack.c.b16 %v2580, %v2578
        %v2613 = vpack.c.b16 %v2581, %v2579
        %2646 = vmatpush.bf16.msra.mxu0 %v2596
        %2647 = vmatpush.bf16.msra.mxu0 %v2594
        %2648 = vmatpush.bf16.msra.mxu0 %v2592
        %2649 = vmatpush.bf16.msra.mxu0 %v2590
        %2650 = vmatpush.bf16.msra.mxu0 %v2588
        %2651 = vmatpush.bf16.msra.mxu0 %v2586
        %2652 = vmatpush.bf16.msra.mxu0 %v2584
        %2653 = vmatpush.bf16.msra.mxu0 %v2582
        %2654 = vmatmul.bf16.gmra.mxu0 %v2449
        %v2655 = vpop.f32.mrf.mxu0
        %v2656 = vadd.f32 %v2484, %v2655
        %v2657 = vpop.f32.mrf.mxu0
        %2658 = vdwg.mxu0
        %2659 = vmatpush.bf16.msra.mxu0 %v2612
        %2660 = vmatpush.bf16.msra.mxu0 %v2610
        %2661 = vmatpush.bf16.msra.mxu0 %v2608
        %2662 = vmatpush.bf16.msra.mxu0 %v2606
        %2663 = vmatpush.bf16.msra.mxu0 %v2604
        %2664 = vmatpush.bf16.msra.mxu0 %v2602
        %2665 = vmatpush.bf16.msra.mxu0 %v2600
        %2666 = vmatpush.bf16.msra.mxu0 %v2598
        %2667 = vmatmul.bf16.gmra.mxu0 %v2450
        %v2668 = vpop.f32.mrf.mxu0
        %v2669 = vadd.f32 %v2656, %v2668
        %v2670 = vpop.f32.mrf.mxu0
        %2671 = vdwg.mxu0
        %2672 = vmatpush.bf16.msra.mxu0 %v2597
        %2673 = vmatpush.bf16.msra.mxu0 %v2595
        %2674 = vmatpush.bf16.msra.mxu0 %v2593
        %2675 = vmatpush.bf16.msra.mxu0 %v2591
        %2676 = vmatpush.bf16.msra.mxu0 %v2589
        %2677 = vmatpush.bf16.msra.mxu0 %v2587
        %2678 = vmatpush.bf16.msra.mxu0 %v2585
        %2679 = vmatpush.bf16.msra.mxu0 %v2583
        %2680 = vmatmul.bf16.gmra.mxu0 %v2449
        %v2681 = vpop.f32.mrf.mxu0
        %v2682 = vadd.f32 %v2485, %v2681
        %v2683 = vpop.f32.mrf.mxu0
        %2684 = vdwg.mxu0
        %2685 = vmatpush.bf16.msra.mxu0 %v2613
        %2686 = vmatpush.bf16.msra.mxu0 %v2611
        %2687 = vmatpush.bf16.msra.mxu0 %v2609
        %2688 = vmatpush.bf16.msra.mxu0 %v2607
        %2689 = vmatpush.bf16.msra.mxu0 %v2605
        %2690 = vmatpush.bf16.msra.mxu0 %v2603
        %2691 = vmatpush.bf16.msra.mxu0 %v2601
        %2692 = vmatpush.bf16.msra.mxu0 %v2599
        %2693 = vmatmul.bf16.gmra.mxu0 %v2450
        %v2694 = vpop.f32.mrf.mxu0
        %v2695 = vadd.f32 %v2682, %v2694
        %v2696 = vpop.f32.mrf.mxu0
        %2697 = vdwg.mxu0
        %v2698 = vmax.f32 %v2669, 0.0
        %v2699 = vmax.f32 %v2695, 0.0
        %v2700 = vpack.c.bf16 %v2698, %v2698
        %v2701 = vpack.c.bf16 %v2699, %v2699
        %s2702 = scalar_lea.vmem %s364, 256 [#allocation10]
        %v2703 = vld [vmem:[%s2702] sm:$0xff]
        %v2704 = vld [vmem:[%s2702 + $0x8] sm:$0xff]
        %v2705 = vld [vmem:[%s2702 + $0x10] sm:$0xff]
        %v2706 = vld [vmem:[%s2702 + $0x18] sm:$0xff]
        %v2707 = vld [vmem:[%s2702 + $0x20] sm:$0xff]
        %v2708 = vld [vmem:[%s2702 + $0x28] sm:$0xff]
        %v2709 = vld [vmem:[%s2702 + $0x30] sm:$0xff]
        %v2710 = vld [vmem:[%s2702 + $0x38] sm:$0xff]
        %v2711 = vld [vmem:[%s2702 + $0x40] sm:$0xff]
        %v2712 = vld [vmem:[%s2702 + $0x48] sm:$0xff]
        %v2713 = vld [vmem:[%s2702 + $0x50] sm:$0xff]
        %v2714 = vld [vmem:[%s2702 + $0x58] sm:$0xff]
        %v2715 = vld [vmem:[%s2702 + $0x60] sm:$0xff]
        %v2716 = vld [vmem:[%s2702 + $0x68] sm:$0xff]
        %v2717 = vld [vmem:[%s2702 + $0x70] sm:$0xff]
        %v2718 = vld [vmem:[%s2702 + $0x78] sm:$0xff]
        %v2719 = vld [vmem:[%s2702 + $0x80] sm:$0xff]
        %v2720 = vld [vmem:[%s2702 + $0x88] sm:$0xff]
        %v2721 = vld [vmem:[%s2702 + $0x90] sm:$0xff]
        %v2722 = vld [vmem:[%s2702 + $0x98] sm:$0xff]
        %v2723 = vld [vmem:[%s2702 + $0xa0] sm:$0xff]
        %v2724 = vld [vmem:[%s2702 + $0xa8] sm:$0xff]
        %v2725 = vld [vmem:[%s2702 + $0xb0] sm:$0xff]
        %v2726 = vld [vmem:[%s2702 + $0xb8] sm:$0xff]
        %v2727 = vld [vmem:[%s2702 + $0xc0] sm:$0xff]
        %v2728 = vld [vmem:[%s2702 + $0xc8] sm:$0xff]
        %v2729 = vld [vmem:[%s2702 + $0xd0] sm:$0xff]
        %v2730 = vld [vmem:[%s2702 + $0xd8] sm:$0xff]
        %v2731 = vld [vmem:[%s2702 + $0xe0] sm:$0xff]
        %v2732 = vld [vmem:[%s2702 + $0xe8] sm:$0xff]
        %v2733 = vld [vmem:[%s2702 + $0xf0] sm:$0xff]
        %v2734 = vld [vmem:[%s2702 + $0xf8] sm:$0xff]
        %v2735 = vperm.slane %v2190, 3
        %v2736 = vperm.slane %v2191, 3
        %v2769 = vunpack.c.l.b16 %v2703
        %v2770 = vunpack.c.h.b16 %v2703
        %v2771 = vunpack.c.l.b16 %v2704
        %v2772 = vunpack.c.h.b16 %v2704
        %v2773 = vunpack.c.l.b16 %v2705
        %v2774 = vunpack.c.h.b16 %v2705
        %v2775 = vunpack.c.l.b16 %v2706
        %v2776 = vunpack.c.h.b16 %v2706
        %v2777 = vunpack.c.l.b16 %v2707
        %v2778 = vunpack.c.h.b16 %v2707
        %v2779 = vunpack.c.l.b16 %v2708
        %v2780 = vunpack.c.h.b16 %v2708
        %v2781 = vunpack.c.l.b16 %v2709
        %v2782 = vunpack.c.h.b16 %v2709
        %v2783 = vunpack.c.l.b16 %v2710
        %v2784 = vunpack.c.h.b16 %v2710
        %v2785 = vunpack.c.l.b16 %v2711
        %v2786 = vunpack.c.h.b16 %v2711
        %v2787 = vunpack.c.l.b16 %v2712
        %v2788 = vunpack.c.h.b16 %v2712
        %v2789 = vunpack.c.l.b16 %v2713
        %v2790 = vunpack.c.h.b16 %v2713
        %v2791 = vunpack.c.l.b16 %v2714
        %v2792 = vunpack.c.h.b16 %v2714
        %v2793 = vunpack.c.l.b16 %v2715
        %v2794 = vunpack.c.h.b16 %v2715
        %v2795 = vunpack.c.l.b16 %v2716
        %v2796 = vunpack.c.h.b16 %v2716
        %v2797 = vunpack.c.l.b16 %v2717
        %v2798 = vunpack.c.h.b16 %v2717
        %v2799 = vunpack.c.l.b16 %v2718
        %v2800 = vunpack.c.h.b16 %v2718
        %v2801 = vunpack.c.l.b16 %v2719
        %v2802 = vunpack.c.h.b16 %v2719
        %v2803 = vunpack.c.l.b16 %v2720
        %v2804 = vunpack.c.h.b16 %v2720
        %v2805 = vunpack.c.l.b16 %v2721
        %v2806 = vunpack.c.h.b16 %v2721
        %v2807 = vunpack.c.l.b16 %v2722
        %v2808 = vunpack.c.h.b16 %v2722
        %v2809 = vunpack.c.l.b16 %v2723
        %v2810 = vunpack.c.h.b16 %v2723
        %v2811 = vunpack.c.l.b16 %v2724
        %v2812 = vunpack.c.h.b16 %v2724
        %v2813 = vunpack.c.l.b16 %v2725
        %v2814 = vunpack.c.h.b16 %v2725
        %v2815 = vunpack.c.l.b16 %v2726
        %v2816 = vunpack.c.h.b16 %v2726
        %v2817 = vunpack.c.l.b16 %v2727
        %v2818 = vunpack.c.h.b16 %v2727
        %v2819 = vunpack.c.l.b16 %v2728
        %v2820 = vunpack.c.h.b16 %v2728
        %v2821 = vunpack.c.l.b16 %v2729
        %v2822 = vunpack.c.h.b16 %v2729
        %v2823 = vunpack.c.l.b16 %v2730
        %v2824 = vunpack.c.h.b16 %v2730
        %v2825 = vunpack.c.l.b16 %v2731
        %v2826 = vunpack.c.h.b16 %v2731
        %v2827 = vunpack.c.l.b16 %v2732
        %v2828 = vunpack.c.h.b16 %v2732
        %v2829 = vunpack.c.l.b16 %v2733
        %v2830 = vunpack.c.h.b16 %v2733
        %v2831 = vunpack.c.l.b16 %v2734
        %v2832 = vunpack.c.h.b16 %v2734
        %v2833 = vpack.c.b16 %v2771, %v2769
        %v2834 = vpack.c.b16 %v2772, %v2770
        %v2835 = vpack.c.b16 %v2775, %v2773
        %v2836 = vpack.c.b16 %v2776, %v2774
        %v2837 = vpack.c.b16 %v2779, %v2777
        %v2838 = vpack.c.b16 %v2780, %v2778
        %v2839 = vpack.c.b16 %v2783, %v2781
        %v2840 = vpack.c.b16 %v2784, %v2782
        %v2841 = vpack.c.b16 %v2787, %v2785
        %v2842 = vpack.c.b16 %v2788, %v2786
        %v2843 = vpack.c.b16 %v2791, %v2789
        %v2844 = vpack.c.b16 %v2792, %v2790
        %v2845 = vpack.c.b16 %v2795, %v2793
        %v2846 = vpack.c.b16 %v2796, %v2794
        %v2847 = vpack.c.b16 %v2799, %v2797
        %v2848 = vpack.c.b16 %v2800, %v2798
        %v2849 = vpack.c.b16 %v2803, %v2801
        %v2850 = vpack.c.b16 %v2804, %v2802
        %v2851 = vpack.c.b16 %v2807, %v2805
        %v2852 = vpack.c.b16 %v2808, %v2806
        %v2853 = vpack.c.b16 %v2811, %v2809
        %v2854 = vpack.c.b16 %v2812, %v2810
        %v2855 = vpack.c.b16 %v2815, %v2813
        %v2856 = vpack.c.b16 %v2816, %v2814
        %v2857 = vpack.c.b16 %v2819, %v2817
        %v2858 = vpack.c.b16 %v2820, %v2818
        %v2859 = vpack.c.b16 %v2823, %v2821
        %v2860 = vpack.c.b16 %v2824, %v2822
        %v2861 = vpack.c.b16 %v2827, %v2825
        %v2862 = vpack.c.b16 %v2828, %v2826
        %v2863 = vpack.c.b16 %v2831, %v2829
        %v2864 = vpack.c.b16 %v2832, %v2830
        %2897 = vmatpush.bf16.msra.mxu0 %v2847
        %2898 = vmatpush.bf16.msra.mxu0 %v2845
        %2899 = vmatpush.bf16.msra.mxu0 %v2843
        %2900 = vmatpush.bf16.msra.mxu0 %v2841
        %2901 = vmatpush.bf16.msra.mxu0 %v2839
        %2902 = vmatpush.bf16.msra.mxu0 %v2837
        %2903 = vmatpush.bf16.msra.mxu0 %v2835
        %2904 = vmatpush.bf16.msra.mxu0 %v2833
        %2905 = vmatmul.bf16.gmra.mxu0 %v2700
        %v2906 = vpop.f32.mrf.mxu0
        %v2907 = vadd.f32 %v2735, %v2906
        %v2908 = vpop.f32.mrf.mxu0
        %2909 = vdwg.mxu0
        %2910 = vmatpush.bf16.msra.mxu0 %v2863
        %2911 = vmatpush.bf16.msra.mxu0 %v2861
        %2912 = vmatpush.bf16.msra.mxu0 %v2859
        %2913 = vmatpush.bf16.msra.mxu0 %v2857
        %2914 = vmatpush.bf16.msra.mxu0 %v2855
        %2915 = vmatpush.bf16.msra.mxu0 %v2853
        %2916 = vmatpush.bf16.msra.mxu0 %v2851
        %2917 = vmatpush.bf16.msra.mxu0 %v2849
        %2918 = vmatmul.bf16.gmra.mxu0 %v2701
        %v2919 = vpop.f32.mrf.mxu0
        %v2920 = vadd.f32 %v2907, %v2919
        %v2921 = vpop.f32.mrf.mxu0
        %2922 = vdwg.mxu0
        %2923 = vmatpush.bf16.msra.mxu0 %v2848
        %2924 = vmatpush.bf16.msra.mxu0 %v2846
        %2925 = vmatpush.bf16.msra.mxu0 %v2844
        %2926 = vmatpush.bf16.msra.mxu0 %v2842
        %2927 = vmatpush.bf16.msra.mxu0 %v2840
        %2928 = vmatpush.bf16.msra.mxu0 %v2838
        %2929 = vmatpush.bf16.msra.mxu0 %v2836
        %2930 = vmatpush.bf16.msra.mxu0 %v2834
        %2931 = vmatmul.bf16.gmra.mxu0 %v2700
        %v2932 = vpop.f32.mrf.mxu0
        %v2933 = vadd.f32 %v2736, %v2932
        %v2934 = vpop.f32.mrf.mxu0
        %2935 = vdwg.mxu0
        %2936 = vmatpush.bf16.msra.mxu0 %v2864
        %2937 = vmatpush.bf16.msra.mxu0 %v2862
        %2938 = vmatpush.bf16.msra.mxu0 %v2860
        %2939 = vmatpush.bf16.msra.mxu0 %v2858
        %2940 = vmatpush.bf16.msra.mxu0 %v2856
        %2941 = vmatpush.bf16.msra.mxu0 %v2854
        %2942 = vmatpush.bf16.msra.mxu0 %v2852
        %2943 = vmatpush.bf16.msra.mxu0 %v2850
        %2944 = vmatmul.bf16.gmra.mxu0 %v2701
        %v2945 = vpop.f32.mrf.mxu0
        %v2946 = vadd.f32 %v2933, %v2945
        %v2947 = vpop.f32.mrf.mxu0
        %2948 = vdwg.mxu0
        %v2949 = vmax.f32 %v2920, 0.0
        %v2950 = vmax.f32 %v2946, 0.0
        %v2951 = vperm.slane %v2190, 4
        %v2952 = vperm.slane %v2191, 4
        %v2953 = vmul.f32 %v2949, %v2951
        %v2954 = vmul.f32 %v2950, %v2952
        %2955 = vadd.xlane.f32.xlu0 %v2953
        %v2956 = vpop.xlane.xlu0 %2955
        %v2957 = vperm.slane %v2190, 5
        %v2958 = vadd.f32 %v2956, %v2957
        %v2959 = vmax.f32 %v2188, %v2958
        %2960 = vadd.xlane.f32.xlu0 %v2954
        %v2961 = vpop.xlane.xlu0 %2960
        %v2962 = vperm.slane %v2191, 5
        %v2963 = vadd.f32 %v2961, %v2962
        %v2964 = vmax.f32 %v2959, %v2963
        %vm2965 = vcmask 7168
        %2966 = vst.msk [vmem:[#allocation2] sm:$0xff] %vm2965, %v2964
        %p2967 = scmp.eq.s32.totalorder %s24, 4
        // Predicated region
        $region69: #{tpu_custom_call.1} parent=43 // pred_check
          %p2968 = pneg %p2967
        $region70: #{tpu_custom_call.1} parent=43 // pred_check_branch
          %2970 = sbr.rel (%p2968) target = $region72
        $region71: #{tpu_custom_call.1} parent=43 // pred_region
          %2971 = vst.msk [vmem:[%s6] sm:$0xff] %vm2965, %v2964
        $region72: #{tpu_custom_call.1} parent=43 // pred_fallthru
          _
        // Predicated region
        $region73: #{tpu_custom_call.1} parent=43 // pred_check
          %p2972 = pneg %p188
        $region74: #{tpu_custom_call.1} parent=43 // pred_check_branch
          %2974 = sbr.rel (%p2972) target = $region76
        $region75: #{tpu_custom_call.1} parent=43 // pred_region
          _
        $region76: #{tpu_custom_call.1} parent=43 // pred_fallthru
          _
        // Predicated region
        $region77: #{tpu_custom_call.1} parent=43 // pred_check
          %p2975 = pneg %p188
        $region78: #{tpu_custom_call.1} parent=43 // pred_check_branch
          %2977 = sbr.rel (%p2975) target = $region80
        $region79: #{tpu_custom_call.1} parent=43 // pred_region
          _
        $region80: #{tpu_custom_call.1} parent=43 // pred_fallthru
          _
      $region44: #{tpu_custom_call.1} parent=5 // pred_fallthru
        _
      %p2978 = scmp.le.s32.totalorder 2, %s19
      // Predicated region
      $region81: #{tpu_custom_call.1} parent=5 // pred_check
        %p2979 = pneg %p2978
      $region82: #{tpu_custom_call.1} parent=5 // pred_check_branch
        %2981 = sbr.rel (%p2979) target = $region84
      $region83: #{tpu_custom_call.1} parent=5 // pred_region
        %s2982 = ssub.s32 %s19, 2
      $region84: #{tpu_custom_call.1} parent=5 // pred_fallthru
        _
    $region6: #{tpu_custom_call.1} parent=1 // loop_footer
      %s23 = sadd.s32 1, %s19
    $region7: #{tpu_custom_call.1} parent=1 // loop_footer_branch
      %18 = sbr.rel target = $region3
    $region8: #{tpu_custom_call.1} parent=1 // loop_exit
      _
    %2983 = vsyncpa [#allocation4], 1
    %s2984 = scalar_lea.sflag [#allocation4], 1
    %2985 = vsyncpa %s2984, 1
    %2986 = vsyncpa [#allocation6], 1
    %s2987 = scalar_lea.sflag [#allocation6], 1
    %2988 = vsyncpa %s2987, 1
    %2989 = vsyncpa [#allocation9], 1
    %s2990 = scalar_lea.sflag [#allocation9], 1
    %2991 = vsyncpa %s2990, 1

</llo_original>
